<compile_context>
chip_gen: v7x
topology: tpu7x:2x2x1
jax: 0.10.0
libtpu: 0.0.40
codegen_flags: <defaults>
</compile_context>

<pallas_src>
import functools

import jax
import jax.numpy as jnp
import numpy as np
from jax.experimental import pallas as pl
from jax.experimental.pallas import tpu as pltpu

LANE = 128


def _round_up(x, m):
    return (x + m - 1) // m * m


def deepfm_kernel(off_ref,   # (tb, F)    int32  global one-hot offsets f*V + id
                  rhs1_ref,  # (FVp, C1)  f32    packed gather/W1/FM/linear RHS (resident)
                  rhs2_ref,  # (C1, C2)   f32    packed W2 + FM/linear combine col (resident)
                  vecs_ref,  # (3, CV)    f32    [b1 ; b2 + scalar bias ; w3 + 1] rows (resident)
                  out_ref,   # (tb, 1)    f32    logits column
                  *, num_fields, h1, h2, e):
    tb = off_ref.shape[0]
    fvp = rhs1_ref.shape[0]
    c1 = rhs1_ref.shape[1]
    c2 = rhs2_ref.shape[1]

    # ---- One-hot "gather" matrix: exactly F ones per row -------------------
    off = off_ref[...]                                           # (tb, F) int32
    col = jax.lax.broadcasted_iota(jnp.int32, (tb, fvp), 1)
    hit = col == off[:, 0:1]
    for f in range(1, num_fields):                               # static unroll, F small
        hit = jnp.logical_or(hit, col == off[:, f:f + 1])
    onehot = hit.astype(jnp.float32)                             # (tb, FVp)

    # ---- Matmul #1 on MXU: gather + W1 + FM sums + linear in one pass ------
    #   cols [0, H1)       : h1 pre-activation
    #   cols [H1, H1+E)    : FM sum over fields of embeddings
    #   col  H1+E          : FM sum of squared embeddings (lane-reduced already)
    #   col  H1+E+1        : first-order (linear) score
    big1 = jnp.dot(onehot, rhs1_ref[...], preferred_element_type=jnp.float32)

    vecs = vecs_ref[...]
    b1_row = vecs[0:1, :c1]
    b2_row = vecs[1:2, :c2]
    w3_row = vecs[2:3, :c2]

    # Per-lane-region transform: ReLU(h1+b1) | square(FM sum) | identity.
    lane1 = jax.lax.broadcasted_iota(jnp.int32, (1, c1), 1)
    relu_mask = lane1 < h1
    sq_mask = jnp.logical_and(lane1 >= h1, lane1 < h1 + e)
    trans = jnp.where(relu_mask, jnp.maximum(big1 + b1_row, 0.0),
                      jnp.where(sq_mask, big1 * big1, big1))

    # ---- Matmul #2 on MXU: W2 + (0.5*FM_sq, -0.5*FM_sumsq, linear) column --
    big2 = jnp.dot(trans, rhs2_ref[...], preferred_element_type=jnp.float32)

    # ---- Final combine: ReLU(h2+b2) . w3  +  (fm + lin + biases) -----------
    lane2 = jax.lax.broadcasted_iota(jnp.int32, (1, c2), 1)
    pre = big2 + b2_row                       # col h2 carries fm+lin+lin_bias+b3
    act = jnp.where(lane2 < h2, jnp.maximum(pre, 0.0), pre)
    out_ref[...] = jnp.sum(act * w3_row, axis=1, keepdims=True)  # (tb, 1)


def deepfm_forward(feature_id, params, *, tb=1024):
    """Compute DeepFM logits: (B, F) int32 -> (B,) float32."""
    lin_table = params["lin_table"]      # (V, 1) f32
    lin_bias = params["lin_bias"]        # (1, 1) f32
    emb_table = params["emb_table"]      # (V, E) f32
    w1, b1 = params["w1"], params["b1"]  # (F*E, H1), (1, H1)
    w2, b2 = params["w2"], params["b2"]  # (H1, H2), (1, H2)
    w3, b3 = params["w3"], params["b3"]  # (H2, 1), (1, 1)

    B, F = feature_id.shape
    V, E = emb_table.shape
    H1, H2 = w1.shape[1], w2.shape[1]
    FV = F * V

    f32 = jnp.float32
    tb = max(LANE, _round_up(tb, LANE))          # batch tile, multiple of 128
    num_tiles = pl.cdiv(B, tb)
    b_pad = num_tiles * tb
    fvp = _round_up(FV, LANE)
    c1 = _round_up(H1 + E + 2, LANE)
    c2 = _round_up(H2 + 1, LANE)
    cv = max(c1, c2)

    # ---- Packed RHS of matmul #1 (tiny, parameter-sized precompute) --------
    w1_eff = jnp.einsum("ve,feh->fvh", emb_table,
                        w1.reshape(F, E, H1)).reshape(FV, H1)
    sumf_cols = jnp.tile(emb_table, (F, 1))                        # (FV, E)
    sumsq_col = jnp.tile(jnp.sum(emb_table * emb_table, axis=1, keepdims=True),
                         (F, 1))                                   # (FV, 1)
    lin_col = jnp.tile(lin_table, (F, 1))                          # (FV, 1)
    rhs1 = jnp.concatenate([w1_eff, sumf_cols, sumsq_col, lin_col], axis=1)
    rhs1 = jnp.pad(rhs1.astype(f32),
                   ((0, fvp - FV), (0, c1 - (H1 + E + 2))))

    # ---- Packed RHS of matmul #2 -------------------------------------------
    rhs2 = jnp.zeros((c1, c2), f32)
    rhs2 = rhs2.at[:H1, :H2].set(w2)
    rhs2 = rhs2.at[H1:H1 + E, H2].set(0.5)       # +0.5 * sum_e (sum_f emb)^2
    rhs2 = rhs2.at[H1 + E, H2].set(-0.5)         # -0.5 * sum_f sum_e emb^2
    rhs2 = rhs2.at[H1 + E + 1, H2].set(1.0)      # + linear score

    # ---- Small resident row vectors merged into one block ------------------
    b1_row = jnp.pad(b1.astype(f32), ((0, 0), (0, cv - H1)))
    b2_row = jnp.zeros((1, cv), f32).at[0, :H2].set(b2[0, :])
    b2_row = b2_row.at[0, H2].set(lin_bias[0, 0] + b3[0, 0])       # fused scalar biases
    w3_row = jnp.zeros((1, cv), f32).at[0, :H2].set(w3[:, 0])
    w3_row = w3_row.at[0, H2].set(1.0)
    vecs = jnp.concatenate([b1_row, b2_row, w3_row], axis=0)       # (3, cv)

    # ---- Only per-sample stream: global one-hot offsets --------------------
    fid = feature_id
    if b_pad != B:
        fid = jnp.pad(feature_id, ((0, b_pad - B), (0, 0)))        # pad id 0 (valid)
    off = fid.astype(jnp.int32) + (V * jnp.arange(F, dtype=jnp.int32))[None, :]

    kernel = functools.partial(deepfm_kernel, num_fields=F, h1=H1, h2=H2, e=E)

    out = pl.pallas_call(
        kernel,
        out_shape=jax.ShapeDtypeStruct((b_pad, 1), f32),
        grid_spec=pltpu.PrefetchScalarGridSpec(
            num_scalar_prefetch=0,
            grid=(num_tiles,),
            in_specs=[
                pl.BlockSpec((tb, F), lambda i: (i, 0)),      # streamed ids
                pl.BlockSpec((fvp, c1), lambda i: (0, 0)),    # resident
                pl.BlockSpec((c1, c2), lambda i: (0, 0)),     # resident
                pl.BlockSpec((3, cv), lambda i: (0, 0)),      # resident
            ],
            out_specs=pl.BlockSpec((tb, 1), lambda i: (i, 0)),
        ),
        compiler_params=pltpu.CompilerParams(
            dimension_semantics=("parallel",)),
    )(off, rhs1, rhs2, vecs)

    return out[:B, 0]                                              # (B,)


def deepfm_reference(feature_id, params):
    """Pure-JAX f32 reference of the PyTorch forward pass."""
    lin_table = params["lin_table"]
    lin_bias = params["lin_bias"]
    emb_table = params["emb_table"]
    B, F = feature_id.shape
    E = emb_table.shape[1]

    linear_score = jnp.sum(lin_table[feature_id, 0], axis=1) + lin_bias[0, 0]
    emb_v = emb_table[feature_id]                                  # (B, F, E)
    square_of_sum = jnp.sum(emb_v, axis=1) ** 2
    sum_of_square = jnp.sum(emb_v ** 2, axis=1)
    fm_score = 0.5 * jnp.sum(square_of_sum - sum_of_square, axis=1)

    x = emb_v.reshape(B, F * E)
    h = jnp.maximum(x @ params["w1"] + params["b1"], 0.0)
    h = jnp.maximum(h @ params["w2"] + params["b2"], 0.0)
    mlp_score = (h @ params["w3"] + params["b3"])[:, 0]
    return linear_score + fm_score + mlp_score


if __name__ == "__main__":
    # net_desc: input_dim=64, input_dim4lookup=8, embed_dim=16,
    #           hidden_dims=[32, 32], dropout_prob=0.0, batch_norm/layer_norm=False
    INPUT_DIM = 64
    F = 8            # input_dim4lookup
    E = 16           # embed_dim
    H1, H2 = 32, 32
    B = 200          # pads to 256 -> 2 grid steps at tb=128
    D = F * E        # mlp_input_dim = 128

    key = jax.random.PRNGKey(0)
    ks = jax.random.split(key, 8)

    params = {
        "lin_table": (jax.random.normal(ks[0], (INPUT_DIM, 1), jnp.float32) * 0.05),
        "lin_bias": jnp.zeros((1, 1), jnp.float32),
        "emb_table": (jax.random.normal(ks[1], (INPUT_DIM, E), jnp.float32) * 0.1),
        "w1": jax.random.normal(ks[2], (D, H1), jnp.float32) * (1.0 / np.sqrt(D)),
        "b1": jnp.zeros((1, H1), jnp.float32),
        "w2": jax.random.normal(ks[3], (H1, H2), jnp.float32) * (1.0 / np.sqrt(H1)),
        "b2": jnp.zeros((1, H2), jnp.float32),
        "w3": jax.random.normal(ks[4], (H2, 1), jnp.float32) * (1.0 / np.sqrt(H2)),
        "b3": jnp.zeros((1, 1), jnp.float32),
    }

    feature_id = jax.random.randint(ks[5], (B, F), 0, INPUT_DIM, dtype=jnp.int32)

    out = deepfm_forward(feature_id, params, tb=128)
    out = jax.block_until_ready(out)

    ref = deepfm_reference(feature_id, params)
    np.testing.assert_allclose(np.asarray(out), np.asarray(ref),
                               rtol=2e-2, atol=2e-2)
    assert out.shape == (B,)
    print("KERNEL_OK")
</pallas_src>

<mosaic_0001>
module attributes {stable_mosaic.version = 11 : i64} {
  func.func @deepfm_kernel(%arg0: i32, %arg1: memref<128x8xi32, #tpu.memory_space<vmem>>, %arg2: memref<512x128xf32, #tpu.memory_space<vmem>>, %arg3: memref<128x128xf32, #tpu.memory_space<vmem>>, %arg4: memref<3x128xf32, #tpu.memory_space<vmem>>, %arg5: memref<128x1xf32, #tpu.memory_space<vmem>>) attributes {dimension_semantics = [#tpu.dimension_semantics<parallel>], iteration_bounds = array<i64: 2>, scalar_prefetch = 0 : i64, scratch_operands = 0 : i64, tpu.core_type = #tpu.core_type<tc>, window_params = [{transform_indices = @transform_0, window_bounds = array<i64: 128, 8>}, {pipeline_mode = #tpu.pipeline_mode<synchronous>, transform_indices = @transform_1, window_bounds = array<i64: 512, 128>}, {pipeline_mode = #tpu.pipeline_mode<synchronous>, transform_indices = @transform_2, window_bounds = array<i64: 128, 128>}, {pipeline_mode = #tpu.pipeline_mode<synchronous>, transform_indices = @transform_3, window_bounds = array<i64: 3, 128>}, {transform_indices = @transform_4, window_bounds = array<i64: 128, 1>}]} {
    %c0 = arith.constant 0 : index
    %c0_0 = arith.constant 0 : index
    %0 = vector.load %arg1[%c0, %c0_0] : memref<128x8xi32, #tpu.memory_space<vmem>>, vector<128x8xi32>
    %1 = tpu.iota {dimensions = array<i32: 1>} : vector<128x512xi32>
    %2 = vector.extract_strided_slice %0 {offsets = [0, 0], sizes = [128, 1], strides = [1, 1]} : vector<128x8xi32> to vector<128x1xi32>
    %3 = vector.broadcast %2 : vector<128x1xi32> to vector<128x512xi32>
    %4 = arith.cmpi eq, %1, %3 : vector<128x512xi32>
    %5 = vector.extract_strided_slice %0 {offsets = [0, 1], sizes = [128, 1], strides = [1, 1]} : vector<128x8xi32> to vector<128x1xi32>
    %6 = vector.broadcast %5 : vector<128x1xi32> to vector<128x512xi32>
    %7 = arith.cmpi eq, %1, %6 : vector<128x512xi32>
    %8 = arith.ori %4, %7 : vector<128x512xi1>
    %9 = vector.extract_strided_slice %0 {offsets = [0, 2], sizes = [128, 1], strides = [1, 1]} : vector<128x8xi32> to vector<128x1xi32>
    %10 = vector.broadcast %9 : vector<128x1xi32> to vector<128x512xi32>
    %11 = arith.cmpi eq, %1, %10 : vector<128x512xi32>
    %12 = arith.ori %8, %11 : vector<128x512xi1>
    %13 = vector.extract_strided_slice %0 {offsets = [0, 3], sizes = [128, 1], strides = [1, 1]} : vector<128x8xi32> to vector<128x1xi32>
    %14 = vector.broadcast %13 : vector<128x1xi32> to vector<128x512xi32>
    %15 = arith.cmpi eq, %1, %14 : vector<128x512xi32>
    %16 = arith.ori %12, %15 : vector<128x512xi1>
    %17 = vector.extract_strided_slice %0 {offsets = [0, 4], sizes = [128, 1], strides = [1, 1]} : vector<128x8xi32> to vector<128x1xi32>
    %18 = vector.broadcast %17 : vector<128x1xi32> to vector<128x512xi32>
    %19 = arith.cmpi eq, %1, %18 : vector<128x512xi32>
    %20 = arith.ori %16, %19 : vector<128x512xi1>
    %21 = vector.extract_strided_slice %0 {offsets = [0, 5], sizes = [128, 1], strides = [1, 1]} : vector<128x8xi32> to vector<128x1xi32>
    %22 = vector.broadcast %21 : vector<128x1xi32> to vector<128x512xi32>
    %23 = arith.cmpi eq, %1, %22 : vector<128x512xi32>
    %24 = arith.ori %20, %23 : vector<128x512xi1>
    %25 = vector.extract_strided_slice %0 {offsets = [0, 6], sizes = [128, 1], strides = [1, 1]} : vector<128x8xi32> to vector<128x1xi32>
    %26 = vector.broadcast %25 : vector<128x1xi32> to vector<128x512xi32>
    %27 = arith.cmpi eq, %1, %26 : vector<128x512xi32>
    %28 = arith.ori %24, %27 : vector<128x512xi1>
    %29 = vector.extract_strided_slice %0 {offsets = [0, 7], sizes = [128, 1], strides = [1, 1]} : vector<128x8xi32> to vector<128x1xi32>
    %30 = vector.broadcast %29 : vector<128x1xi32> to vector<128x512xi32>
    %31 = arith.cmpi eq, %1, %30 : vector<128x512xi32>
    %32 = arith.ori %28, %31 : vector<128x512xi1>
    %33 = arith.extui %32 : vector<128x512xi1> to vector<128x512xi32>
    %34 = arith.sitofp %33 : vector<128x512xi32> to vector<128x512xf32>
    %c0_1 = arith.constant 0 : index
    %c0_2 = arith.constant 0 : index
    %35 = vector.load %arg2[%c0_1, %c0_2] : memref<512x128xf32, #tpu.memory_space<vmem>>, vector<512x128xf32>
    %cst = arith.constant dense<0.000000e+00> : vector<128x128xf32>
    %36 = tpu.matmul %34, %35, %cst {dimension_numbers = #tpu.dot_dimension_numbers<[1], [0], [0], [1], [0, 0, 1, 1], [], []>} : vector<128x512xf32>, vector<512x128xf32>, vector<128x128xf32> -> vector<128x128xf32>
    %c0_3 = arith.constant 0 : index
    %c0_4 = arith.constant 0 : index
    %37 = vector.load %arg4[%c0_3, %c0_4] : memref<3x128xf32, #tpu.memory_space<vmem>>, vector<3x128xf32>
    %38 = vector.extract_strided_slice %37 {offsets = [0, 0], sizes = [1, 128], strides = [1, 1]} : vector<3x128xf32> to vector<1x128xf32>
    %39 = vector.extract_strided_slice %37 {offsets = [1, 0], sizes = [1, 128], strides = [1, 1]} : vector<3x128xf32> to vector<1x128xf32>
    %40 = vector.extract_strided_slice %37 {offsets = [2, 0], sizes = [1, 128], strides = [1, 1]} : vector<3x128xf32> to vector<1x128xf32>
    %41 = tpu.iota {dimensions = array<i32: 1>} : vector<1x128xi32>
    %c32_i32 = arith.constant 32 : i32
    %42 = vector.broadcast %c32_i32 : i32 to vector<1x128xi32>
    %43 = arith.cmpi slt, %41, %42 : vector<1x128xi32>
    %c32_i32_5 = arith.constant 32 : i32
    %44 = vector.broadcast %c32_i32_5 : i32 to vector<1x128xi32>
    %45 = arith.cmpi sge, %41, %44 : vector<1x128xi32>
    %c48_i32 = arith.constant 48 : i32
    %46 = vector.broadcast %c48_i32 : i32 to vector<1x128xi32>
    %47 = arith.cmpi slt, %41, %46 : vector<1x128xi32>
    %48 = arith.andi %45, %47 : vector<1x128xi1>
    %49 = vector.broadcast %38 : vector<1x128xf32> to vector<128x128xf32>
    %50 = arith.addf %36, %49 : vector<128x128xf32>
    %cst_6 = arith.constant 0.000000e+00 : f32
    %51 = vector.broadcast %cst_6 : f32 to vector<128x128xf32>
    %52 = arith.maximumf %50, %51 : vector<128x128xf32>
    %53 = arith.mulf %36, %36 : vector<128x128xf32>
    %54 = vector.shape_cast %48 : vector<1x128xi1> to vector<1x128xi1>
    %55 = vector.broadcast %54 : vector<1x128xi1> to vector<128x128xi1>
    %56 = arith.select %55, %53, %36 : vector<128x128xi1>, vector<128x128xf32>
    %57 = vector.shape_cast %43 : vector<1x128xi1> to vector<1x128xi1>
    %58 = vector.broadcast %57 : vector<1x128xi1> to vector<128x128xi1>
    %59 = arith.select %58, %52, %56 : vector<128x128xi1>, vector<128x128xf32>
    %c0_7 = arith.constant 0 : index
    %c0_8 = arith.constant 0 : index
    %60 = vector.load %arg3[%c0_7, %c0_8] : memref<128x128xf32, #tpu.memory_space<vmem>>, vector<128x128xf32>
    %cst_9 = arith.constant dense<0.000000e+00> : vector<128x128xf32>
    %61 = tpu.matmul %59, %60, %cst_9 {dimension_numbers = #tpu.dot_dimension_numbers<[1], [0], [0], [1], [0, 0, 1, 1], [], []>} : vector<128x128xf32>, vector<128x128xf32>, vector<128x128xf32> -> vector<128x128xf32>
    %62 = tpu.iota {dimensions = array<i32: 1>} : vector<1x128xi32>
    %63 = vector.broadcast %39 : vector<1x128xf32> to vector<128x128xf32>
    %64 = arith.addf %61, %63 : vector<128x128xf32>
    %c32_i32_10 = arith.constant 32 : i32
    %65 = vector.broadcast %c32_i32_10 : i32 to vector<1x128xi32>
    %66 = arith.cmpi slt, %62, %65 : vector<1x128xi32>
    %cst_11 = arith.constant 0.000000e+00 : f32
    %67 = vector.broadcast %cst_11 : f32 to vector<128x128xf32>
    %68 = arith.maximumf %64, %67 : vector<128x128xf32>
    %69 = vector.shape_cast %66 : vector<1x128xi1> to vector<1x128xi1>
    %70 = vector.broadcast %69 : vector<1x128xi1> to vector<128x128xi1>
    %71 = arith.select %70, %68, %64 : vector<128x128xi1>, vector<128x128xf32>
    %72 = vector.broadcast %40 : vector<1x128xf32> to vector<128x128xf32>
    %73 = arith.mulf %71, %72 : vector<128x128xf32>
    %cst_12 = arith.constant dense<0.000000e+00> : vector<128xf32>
    %74 = vector.multi_reduction <add>, %73, %cst_12 [1] : vector<128x128xf32> to vector<128xf32>
    %75 = vector.shape_cast %74 : vector<128xf32> to vector<128x1xf32>
    %c0_13 = arith.constant 0 : index
    %c0_14 = arith.constant 0 : index
    %76 = vector.load %arg5[%c0_13, %c0_14] : memref<128x1xf32, #tpu.memory_space<vmem>>, vector<128x1xf32>
    tpu.vector_store %arg5[%c0_13, %c0_14], %75 {strides = array<i32>} : memref<128x1xf32, #tpu.memory_space<vmem>>, vector<128x1xf32>,
    return
  }
  func.func @transform_0(%arg0: i32) -> (i32, i32) {
    %c0_i32 = arith.constant 0 : i32
    %c0_i32_0 = arith.constant 0 : i32
    return %arg0, %c0_i32 : i32, i32
  }
  func.func @transform_1(%arg0: i32) -> (i32, i32) {
    %c0_i32 = arith.constant 0 : i32
    %c0_i32_0 = arith.constant 0 : i32
    %c0_i32_1 = arith.constant 0 : i32
    return %c0_i32, %c0_i32_0 : i32, i32
  }
  func.func @transform_2(%arg0: i32) -> (i32, i32) {
    %c0_i32 = arith.constant 0 : i32
    %c0_i32_0 = arith.constant 0 : i32
    %c0_i32_1 = arith.constant 0 : i32
    return %c0_i32, %c0_i32_0 : i32, i32
  }
  func.func @transform_3(%arg0: i32) -> (i32, i32) {
    %c0_i32 = arith.constant 0 : i32
    %c0_i32_0 = arith.constant 0 : i32
    %c0_i32_1 = arith.constant 0 : i32
    return %c0_i32, %c0_i32_0 : i32, i32
  }
  func.func @transform_4(%arg0: i32) -> (i32, i32) {
    %c0_i32 = arith.constant 0 : i32
    %c0_i32_0 = arith.constant 0 : i32
    return %arg0, %c0_i32 : i32, i32
  }
}

</mosaic_0001>

<llo_original>
// kernel: tpu_custom_call.1
$region0: #{tpu_custom_call.1}
  #allocation0 [shape = 'u32[]', space=smem, size = 0x4, offset = 0x4, fixed_abs, tag = 'smem constant byte address 0x4 - core index']
  #allocation1 [shape = 'u32[144,128]{1,0:T(1,128)}', space=vmem, size = 0x12000, scoped, tag = 'internal scratch']
  %s0 = inlined_call_operand.vmem [shape: s32[256,8], index: 0, kind: input, shape index: {}]
  %s1 = inlined_call_operand.hbm [shape: f32[512,128], index: 1, kind: input, shape index: {}]
  %s2 = inlined_call_operand.vmem [shape: f32[128,128], index: 2, kind: input, shape index: {}]
  %s3 = inlined_call_operand.vmem [shape: f32[3,128], index: 3, kind: input, shape index: {}]
  %s4 = inlined_call_operand.vmem [shape: f32[256,1], index: 4, kind: output, shape index: {}]
  %s5 = sld [smem:[#allocation0]]
  $region53: #{tpu_custom_call.1} parent=0
    _
  %s7 = ssub.s32 1, %s5
  %s8 = scalar_select 0, %s7, %s5
  $region1: #{tpu_custom_call.1} parent=0
    #allocation2 [shape = 'u8[262144]{0}', space=vmem, size = 0x40000, scoped, tag = 'input window, operand 1, single buffered']
    #allocation3 [shape = 's32[2]{0}', space=sflag, size = 0x8, scoped, tag = 'scoped memory for tpu_custom_call.1']
    %9 = vsyncpa [#allocation3], 0
    loop: start=0, step=1, limit=4
    $region2: #{tpu_custom_call.1} parent=1 // loop_pre_header
      _
    $region3: #{tpu_custom_call.1} parent=1 // loop_header
      %s11 = sphi 0, %s15
      %p12 = scmp.ge.s32.totalorder %s11, 4
      %s21 = sphi 0, %s23
      %s24 = sphi 0, %s21
      %s25 = sphi 0, %s24
      %s41 = sphi 0, %s25
      %s45 = sphi 0, %s45
      %s47 = sphi 0, %s45
      %s48 = sphi 0, %s47
      %s62 = sphi 0, %s48
      %s66 = sphi 0, %s66
      %s68 = sphi 0, %s66
      %s69 = sphi 0, %s68
      %s83 = sphi 0, %s69
      %s87 = sphi 0, %s87
      %s89 = sphi 0, %s87
      %s90 = sphi 0, %s89
      %s104 = sphi 0, %s90
      %s110 = sphi 0, %s112
      %s113 = sphi 0, %s110
      %s114 = sphi 0, %s113
      %s130 = sphi 0, %s114
    $region4: #{tpu_custom_call.1} parent=1 // loop_header_branch
      %14 = sbr.rel (%p12) target = $region8
    $region5: #{tpu_custom_call.1} parent=1 // loop_body
      %s16 = ssub.s32 %s11, 1
      %s17 = ssub.s32 %s11, 2
      %s18 = sadd.s32 %s11, 1
      %s19 = ssub.s32 %s11, %s18
      %p20 = scmp.eq.s32.totalorder %s19, 0
      %s22 = sadd.s32 %s21, 1
      %s23 = scalar_select %p20, %s21, %s22
      %p26 = pneg %p20
      %p27 = scmp.eq.s32.totalorder %s11, 1
      %p28 = por %p26, %p27
      %p29 = scmp.ne.s32.totalorder %s21, %s24
      %p30 = scmp.eq.s32.totalorder %s11, 0
      %p31 = por %p29, %p30
      %p32 = scmp.ne.s32.totalorder %s21, %s24
      %p33 = scmp.eq.s32.totalorder %s16, 1
      %p34 = por %p32, %p33
      %p35 = scmp.ne.s32.totalorder %s24, %s25
      %p36 = scmp.eq.s32.totalorder %s16, 0
      %p37 = por %p35, %p36
      %p38 = scmp.ne.s32.totalorder %s24, %s25
      %p39 = scmp.eq.s32.totalorder %s17, 1
      %p40 = por %p38, %p39
      %p42 = scmp.ne.s32.totalorder %s25, %s41
      %p43 = scmp.eq.s32.totalorder %s17, 0
      %p44 = por %p42, %p43
      %s46 = sadd.s32 %s45, 1
      %p49 = scmp.eq.s32.totalorder %s11, 1
      %p50 = scmp.ne.s32.totalorder %s45, %s47
      %p51 = scmp.eq.s32.totalorder %s11, 0
      %p52 = por %p50, %p51
      %p53 = scmp.ne.s32.totalorder %s45, %s47
      %p54 = scmp.eq.s32.totalorder %s16, 1
      %p55 = por %p53, %p54
      %p56 = scmp.ne.s32.totalorder %s47, %s48
      %p57 = scmp.eq.s32.totalorder %s16, 0
      %p58 = por %p56, %p57
      %p59 = scmp.ne.s32.totalorder %s47, %s48
      %p60 = scmp.eq.s32.totalorder %s17, 1
      %p61 = por %p59, %p60
      %p63 = scmp.ne.s32.totalorder %s48, %s62
      %p64 = scmp.eq.s32.totalorder %s17, 0
      %p65 = por %p63, %p64
      %s67 = sadd.s32 %s66, 1
      %p70 = scmp.eq.s32.totalorder %s11, 1
      %p71 = scmp.ne.s32.totalorder %s66, %s68
      %p72 = scmp.eq.s32.totalorder %s11, 0
      %p73 = por %p71, %p72
      %p74 = scmp.ne.s32.totalorder %s66, %s68
      %p75 = scmp.eq.s32.totalorder %s16, 1
      %p76 = por %p74, %p75
      %p77 = scmp.ne.s32.totalorder %s68, %s69
      %p78 = scmp.eq.s32.totalorder %s16, 0
      %p79 = por %p77, %p78
      %p80 = scmp.ne.s32.totalorder %s68, %s69
      %p81 = scmp.eq.s32.totalorder %s17, 1
      %p82 = por %p80, %p81
      %p84 = scmp.ne.s32.totalorder %s69, %s83
      %p85 = scmp.eq.s32.totalorder %s17, 0
      %p86 = por %p84, %p85
      %s88 = sadd.s32 %s87, 1
      %p91 = scmp.eq.s32.totalorder %s11, 1
      %p92 = scmp.ne.s32.totalorder %s87, %s89
      %p93 = scmp.eq.s32.totalorder %s11, 0
      %p94 = por %p92, %p93
      %p95 = scmp.ne.s32.totalorder %s87, %s89
      %p96 = scmp.eq.s32.totalorder %s16, 1
      %p97 = por %p95, %p96
      %p98 = scmp.ne.s32.totalorder %s89, %s90
      %p99 = scmp.eq.s32.totalorder %s16, 0
      %p100 = por %p98, %p99
      %p101 = scmp.ne.s32.totalorder %s89, %s90
      %p102 = scmp.eq.s32.totalorder %s17, 1
      %p103 = por %p101, %p102
      %p105 = scmp.ne.s32.totalorder %s90, %s104
      %p106 = scmp.eq.s32.totalorder %s17, 0
      %p107 = por %p105, %p106
      %s108 = ssub.s32 %s11, %s18
      %p109 = scmp.eq.s32.totalorder %s108, 0
      %s111 = sadd.s32 %s110, 1
      %s112 = scalar_select %p109, %s110, %s111
      %p115 = pneg %p109
      %p116 = scmp.eq.s32.totalorder %s11, 1
      %p117 = por %p115, %p116
      %p118 = scmp.ne.s32.totalorder %s110, %s113
      %p119 = scmp.eq.s32.totalorder %s11, 0
      %p120 = por %p118, %p119
      %p121 = scmp.ne.s32.totalorder %s110, %s113
      %p122 = scmp.eq.s32.totalorder %s16, 1
      %p123 = por %p121, %p122
      %p124 = scmp.ne.s32.totalorder %s113, %s114
      %p125 = scmp.eq.s32.totalorder %s16, 0
      %p126 = por %p124, %p125
      %p127 = scmp.ne.s32.totalorder %s113, %s114
      %p128 = scmp.eq.s32.totalorder %s17, 1
      %p129 = por %p127, %p128
      %p131 = scmp.ne.s32.totalorder %s114, %s130
      %p132 = scmp.eq.s32.totalorder %s17, 0
      %p133 = por %p131, %p132
      %p134 = scmp.le.s32.totalorder 1, %s11
      %p135 = scmp.lt.s32.totalorder %s11, 3
      %p136 = pnand %p134, %p135
      %p137 = pneg %p136
      // Predicated region
      $region9: #{tpu_custom_call.1} parent=5 // pred_check
        _
      $region10: #{tpu_custom_call.1} parent=5 // pred_check_branch
        %139 = sbr.rel (%p136) target = $region12
      $region11: #{tpu_custom_call.1} parent=5 // pred_region
        %s140 = ssub.s32 %s11, 1
        // Predicated region
        $region13: #{tpu_custom_call.1} parent=11 // pred_check
          %p141 = pneg %p58
        $region14: #{tpu_custom_call.1} parent=11 // pred_check_branch
          %143 = sbr.rel (%p141) target = $region16
        $region15: #{tpu_custom_call.1} parent=11 // pred_region
          %s145 = ssub.s32 8192, 8192
          %146 = vsyncadd [#allocation3], %s145
          %s147 = sshll.u32 [#allocation2], 4
          %s148 = int_to_ptr.vmem [resolvable:$true] %s147
          %153 = dma.hbm_to_vmem [thread:$0]  %s1, 8192, %s148, [#allocation3], 128, 128, 8
        $region16: #{tpu_custom_call.1} parent=11 // pred_fallthru
          _
        // Predicated region
        $region17: #{tpu_custom_call.1} parent=11 // pred_check
          %p154 = pneg %p79
        $region18: #{tpu_custom_call.1} parent=11 // pred_check_branch
          %156 = sbr.rel (%p154) target = $region20
        $region19: #{tpu_custom_call.1} parent=11 // pred_region
          _
        $region20: #{tpu_custom_call.1} parent=11 // pred_fallthru
          _
        // Predicated region
        $region21: #{tpu_custom_call.1} parent=11 // pred_check
          %p157 = pneg %p100
        $region22: #{tpu_custom_call.1} parent=11 // pred_check_branch
          %159 = sbr.rel (%p157) target = $region24
        $region23: #{tpu_custom_call.1} parent=11 // pred_region
          _
        $region24: #{tpu_custom_call.1} parent=11 // pred_fallthru
          _
      $region12: #{tpu_custom_call.1} parent=5 // pred_fallthru
        _
      %p160 = scmp.lt.s32.totalorder %s11, 2
      // Predicated region
      $region25: #{tpu_custom_call.1} parent=5 // pred_check
        %p161 = pneg %p160
      $region26: #{tpu_custom_call.1} parent=5 // pred_check_branch
        %163 = sbr.rel (%p161) target = $region28
      $region27: #{tpu_custom_call.1} parent=5 // pred_region
        // Predicated region
        $region29: #{tpu_custom_call.1} parent=27 // pred_check
          %p164 = pneg %p31
        $region30: #{tpu_custom_call.1} parent=27 // pred_check_branch
          %166 = sbr.rel (%p164) target = $region32
        $region31: #{tpu_custom_call.1} parent=27 // pred_region
          %s167 = smul.u32 16, %s11
          %p168 = scmp.lt.s32.totalorder %s167, 31
          %s169 = scalar_select %p168, %s167, 31
          %s170 = smul.addr %s169, 8
          %s171 = scalar_lea.vmem %s0, %s170
          %s172 = smul.u32 16, %s11
        $region32: #{tpu_custom_call.1} parent=27 // pred_fallthru
          _
      $region28: #{tpu_custom_call.1} parent=5 // pred_fallthru
        _
      %p173 = scmp.le.s32.totalorder 1, %s11
      %p174 = scmp.lt.s32.totalorder %s11, 3
      %p175 = pnand %p173, %p174
      %p176 = pneg %p175
      // Predicated region
      $region33: #{tpu_custom_call.1} parent=5 // pred_check
        _
      $region34: #{tpu_custom_call.1} parent=5 // pred_check_branch
        %178 = sbr.rel (%p175) target = $region36
      $region35: #{tpu_custom_call.1} parent=5 // pred_region
        %s179 = ssub.s32 %s11, 1
        // Predicated region
        $region37: #{tpu_custom_call.1} parent=35 // pred_check
          %p180 = pneg %p58
        $region38: #{tpu_custom_call.1} parent=35 // pred_check_branch
          %182 = sbr.rel (%p180) target = $region40
        $region39: #{tpu_custom_call.1} parent=35 // pred_region
          %183 = dma.done [#allocation3], 8192
        $region40: #{tpu_custom_call.1} parent=35 // pred_fallthru
          _
        %s184 = smul.u32 16, %s16
        %p185 = scmp.lt.s32.totalorder %s184, 31
        %s186 = scalar_select %p185, %s184, 31
        %s187 = smul.addr %s186, 8
        %s188 = scalar_lea.vmem %s0, %s187
        %p189 = pneg %p37
        %p190 = pneg %p34
        %p191 = pneg %p58
        %p192 = pneg %p55
        %p193 = pneg %p79
        %p194 = pneg %p76
        %p195 = pneg %p100
        %p196 = pneg %p97
        %p197 = pneg %p126
        %p198 = pneg %p123
        %s199 = smul.u32 16, %s16
        %p200 = scmp.lt.s32.totalorder %s199, 31
        %s201 = scalar_select %p200, %s199, 31
        %s202 = smul.addr %s201, 8
        %s203 = scalar_lea.vmem %s4, %s202
        %s204 = smul.u32 16, %s16
        %p205 = scmp.lt.s32.totalorder %s204, 31
        %s206 = scalar_select %p205, %s204, 31
        %s207 = smul.addr %s206, 8
        %s208 = scalar_lea.vmem %s0, %s207
        %s209 = smul.u32 16, %s16
        %s210 = smul.u32 16, %s16
        %p211 = scmp.lt.s32.totalorder %s210, 31
        %s212 = scalar_select %p211, %s210, 31
        %s213 = smul.addr %s212, 8
        %s214 = scalar_lea.vmem %s4, %s213
        %s215 = smul.u32 16, %s16
        %v216 = vld [vmem:[%s208] sm:$0xff]
        %v217 = vld [vmem:[%s208 + $0x8] sm:$0xff]
        %v218 = vld [vmem:[%s208 + $0x10] sm:$0xff]
        %v219 = vld [vmem:[%s208 + $0x18] sm:$0xff]
        %v220 = vld [vmem:[%s208 + $0x20] sm:$0xff]
        %v221 = vld [vmem:[%s208 + $0x28] sm:$0xff]
        %v222 = vld [vmem:[%s208 + $0x30] sm:$0xff]
        %v223 = vld [vmem:[%s208 + $0x38] sm:$0xff]
        %v224 = vld [vmem:[%s208 + $0x40] sm:$0xff]
        %v225 = vld [vmem:[%s208 + $0x48] sm:$0xff]
        %v226 = vld [vmem:[%s208 + $0x50] sm:$0xff]
        %v227 = vld [vmem:[%s208 + $0x58] sm:$0xff]
        %v228 = vld [vmem:[%s208 + $0x60] sm:$0xff]
        %v229 = vld [vmem:[%s208 + $0x68] sm:$0xff]
        %v230 = vld [vmem:[%s208 + $0x70] sm:$0xff]
        %v231 = vld [vmem:[%s208 + $0x78] sm:$0xff]
        %v232 = vlaneseq
        %v233 = vand.u32 %v232, 127
        %v234 = vadd.s32 %v233, 128
        %v235 = vadd.s32 %v233, 256
        %v236 = vadd.s32 %v233, 384
        %237 = vset.pattern.permute.xlu0 0
        %238 = vperm.xlu0 %237, %v216
        %v239 = vpop.permute.xlu0 %238
        %240 = vset.pattern.permute.xlu0 0
        %241 = vperm.xlu0 %240, %v217
        %v242 = vpop.permute.xlu0 %241
        %243 = vset.pattern.permute.xlu0 0
        %244 = vperm.xlu0 %243, %v218
        %v245 = vpop.permute.xlu0 %244
        %246 = vset.pattern.permute.xlu0 0
        %247 = vperm.xlu0 %246, %v219
        %v248 = vpop.permute.xlu0 %247
        %249 = vset.pattern.permute.xlu0 0
        %250 = vperm.xlu0 %249, %v220
        %v251 = vpop.permute.xlu0 %250
        %252 = vset.pattern.permute.xlu0 0
        %253 = vperm.xlu0 %252, %v221
        %v254 = vpop.permute.xlu0 %253
        %255 = vset.pattern.permute.xlu0 0
        %256 = vperm.xlu0 %255, %v222
        %v257 = vpop.permute.xlu0 %256
        %258 = vset.pattern.permute.xlu0 0
        %259 = vperm.xlu0 %258, %v223
        %v260 = vpop.permute.xlu0 %259
        %261 = vset.pattern.permute.xlu0 0
        %262 = vperm.xlu0 %261, %v224
        %v263 = vpop.permute.xlu0 %262
        %264 = vset.pattern.permute.xlu0 0
        %265 = vperm.xlu0 %264, %v225
        %v266 = vpop.permute.xlu0 %265
        %267 = vset.pattern.permute.xlu0 0
        %268 = vperm.xlu0 %267, %v226
        %v269 = vpop.permute.xlu0 %268
        %270 = vset.pattern.permute.xlu0 0
        %271 = vperm.xlu0 %270, %v227
        %v272 = vpop.permute.xlu0 %271
        %273 = vset.pattern.permute.xlu0 0
        %274 = vperm.xlu0 %273, %v228
        %v275 = vpop.permute.xlu0 %274
        %276 = vset.pattern.permute.xlu0 0
        %277 = vperm.xlu0 %276, %v229
        %v278 = vpop.permute.xlu0 %277
        %279 = vset.pattern.permute.xlu0 0
        %280 = vperm.xlu0 %279, %v230
        %v281 = vpop.permute.xlu0 %280
        %282 = vset.pattern.permute.xlu0 0
        %283 = vperm.xlu0 %282, %v231
        %v284 = vpop.permute.xlu0 %283
        %vm285 = vcmp.eq.s32.totalorder %v233, %v239
        %vm286 = vcmp.eq.s32.totalorder %v234, %v239
        %vm287 = vcmp.eq.s32.totalorder %v235, %v239
        %vm288 = vcmp.eq.s32.totalorder %v236, %v239
        %vm289 = vcmp.eq.s32.totalorder %v233, %v242
        %vm290 = vcmp.eq.s32.totalorder %v234, %v242
        %vm291 = vcmp.eq.s32.totalorder %v235, %v242
        %vm292 = vcmp.eq.s32.totalorder %v236, %v242
        %vm293 = vcmp.eq.s32.totalorder %v233, %v245
        %vm294 = vcmp.eq.s32.totalorder %v234, %v245
        %vm295 = vcmp.eq.s32.totalorder %v235, %v245
        %vm296 = vcmp.eq.s32.totalorder %v236, %v245
        %vm297 = vcmp.eq.s32.totalorder %v233, %v248
        %vm298 = vcmp.eq.s32.totalorder %v234, %v248
        %vm299 = vcmp.eq.s32.totalorder %v235, %v248
        %vm300 = vcmp.eq.s32.totalorder %v236, %v248
        %vm301 = vcmp.eq.s32.totalorder %v233, %v251
        %vm302 = vcmp.eq.s32.totalorder %v234, %v251
        %vm303 = vcmp.eq.s32.totalorder %v235, %v251
        %vm304 = vcmp.eq.s32.totalorder %v236, %v251
        %vm305 = vcmp.eq.s32.totalorder %v233, %v254
        %vm306 = vcmp.eq.s32.totalorder %v234, %v254
        %vm307 = vcmp.eq.s32.totalorder %v235, %v254
        %vm308 = vcmp.eq.s32.totalorder %v236, %v254
        %vm309 = vcmp.eq.s32.totalorder %v233, %v257
        %vm310 = vcmp.eq.s32.totalorder %v234, %v257
        %vm311 = vcmp.eq.s32.totalorder %v235, %v257
        %vm312 = vcmp.eq.s32.totalorder %v236, %v257
        %vm313 = vcmp.eq.s32.totalorder %v233, %v260
        %vm314 = vcmp.eq.s32.totalorder %v234, %v260
        %vm315 = vcmp.eq.s32.totalorder %v235, %v260
        %vm316 = vcmp.eq.s32.totalorder %v236, %v260
        %vm317 = vcmp.eq.s32.totalorder %v233, %v263
        %vm318 = vcmp.eq.s32.totalorder %v234, %v263
        %vm319 = vcmp.eq.s32.totalorder %v235, %v263
        %vm320 = vcmp.eq.s32.totalorder %v236, %v263
        %vm321 = vcmp.eq.s32.totalorder %v233, %v266
        %vm322 = vcmp.eq.s32.totalorder %v234, %v266
        %vm323 = vcmp.eq.s32.totalorder %v235, %v266
        %vm324 = vcmp.eq.s32.totalorder %v236, %v266
        %vm325 = vcmp.eq.s32.totalorder %v233, %v269
        %vm326 = vcmp.eq.s32.totalorder %v234, %v269
        %vm327 = vcmp.eq.s32.totalorder %v235, %v269
        %vm328 = vcmp.eq.s32.totalorder %v236, %v269
        %vm329 = vcmp.eq.s32.totalorder %v233, %v272
        %vm330 = vcmp.eq.s32.totalorder %v234, %v272
        %vm331 = vcmp.eq.s32.totalorder %v235, %v272
        %vm332 = vcmp.eq.s32.totalorder %v236, %v272
        %vm333 = vcmp.eq.s32.totalorder %v233, %v275
        %vm334 = vcmp.eq.s32.totalorder %v234, %v275
        %vm335 = vcmp.eq.s32.totalorder %v235, %v275
        %vm336 = vcmp.eq.s32.totalorder %v236, %v275
        %vm337 = vcmp.eq.s32.totalorder %v233, %v278
        %vm338 = vcmp.eq.s32.totalorder %v234, %v278
        %vm339 = vcmp.eq.s32.totalorder %v235, %v278
        %vm340 = vcmp.eq.s32.totalorder %v236, %v278
        %vm341 = vcmp.eq.s32.totalorder %v233, %v281
        %vm342 = vcmp.eq.s32.totalorder %v234, %v281
        %vm343 = vcmp.eq.s32.totalorder %v235, %v281
        %vm344 = vcmp.eq.s32.totalorder %v236, %v281
        %vm345 = vcmp.eq.s32.totalorder %v233, %v284
        %vm346 = vcmp.eq.s32.totalorder %v234, %v284
        %vm347 = vcmp.eq.s32.totalorder %v235, %v284
        %vm348 = vcmp.eq.s32.totalorder %v236, %v284
        %349 = vset.pattern.permute.xlu0 1
        %350 = vperm.xlu0 %349, %v216
        %v351 = vpop.permute.xlu0 %350
        %352 = vset.pattern.permute.xlu0 1
        %353 = vperm.xlu0 %352, %v217
        %v354 = vpop.permute.xlu0 %353
        %355 = vset.pattern.permute.xlu0 1
        %356 = vperm.xlu0 %355, %v218
        %v357 = vpop.permute.xlu0 %356
        %358 = vset.pattern.permute.xlu0 1
        %359 = vperm.xlu0 %358, %v219
        %v360 = vpop.permute.xlu0 %359
        %361 = vset.pattern.permute.xlu0 1
        %362 = vperm.xlu0 %361, %v220
        %v363 = vpop.permute.xlu0 %362
        %364 = vset.pattern.permute.xlu0 1
        %365 = vperm.xlu0 %364, %v221
        %v366 = vpop.permute.xlu0 %365
        %367 = vset.pattern.permute.xlu0 1
        %368 = vperm.xlu0 %367, %v222
        %v369 = vpop.permute.xlu0 %368
        %370 = vset.pattern.permute.xlu0 1
        %371 = vperm.xlu0 %370, %v223
        %v372 = vpop.permute.xlu0 %371
        %373 = vset.pattern.permute.xlu0 1
        %374 = vperm.xlu0 %373, %v224
        %v375 = vpop.permute.xlu0 %374
        %376 = vset.pattern.permute.xlu0 1
        %377 = vperm.xlu0 %376, %v225
        %v378 = vpop.permute.xlu0 %377
        %379 = vset.pattern.permute.xlu0 1
        %380 = vperm.xlu0 %379, %v226
        %v381 = vpop.permute.xlu0 %380
        %382 = vset.pattern.permute.xlu0 1
        %383 = vperm.xlu0 %382, %v227
        %v384 = vpop.permute.xlu0 %383
        %385 = vset.pattern.permute.xlu0 1
        %386 = vperm.xlu0 %385, %v228
        %v387 = vpop.permute.xlu0 %386
        %388 = vset.pattern.permute.xlu0 1
        %389 = vperm.xlu0 %388, %v229
        %v390 = vpop.permute.xlu0 %389
        %391 = vset.pattern.permute.xlu0 1
        %392 = vperm.xlu0 %391, %v230
        %v393 = vpop.permute.xlu0 %392
        %394 = vset.pattern.permute.xlu0 1
        %395 = vperm.xlu0 %394, %v231
        %v396 = vpop.permute.xlu0 %395
        %vm397 = vcmp.eq.s32.totalorder %v233, %v351
        %vm398 = vcmp.eq.s32.totalorder %v234, %v351
        %vm399 = vcmp.eq.s32.totalorder %v235, %v351
        %vm400 = vcmp.eq.s32.totalorder %v236, %v351
        %vm401 = vcmp.eq.s32.totalorder %v233, %v354
        %vm402 = vcmp.eq.s32.totalorder %v234, %v354
        %vm403 = vcmp.eq.s32.totalorder %v235, %v354
        %vm404 = vcmp.eq.s32.totalorder %v236, %v354
        %vm405 = vcmp.eq.s32.totalorder %v233, %v357
        %vm406 = vcmp.eq.s32.totalorder %v234, %v357
        %vm407 = vcmp.eq.s32.totalorder %v235, %v357
        %vm408 = vcmp.eq.s32.totalorder %v236, %v357
        %vm409 = vcmp.eq.s32.totalorder %v233, %v360
        %vm410 = vcmp.eq.s32.totalorder %v234, %v360
        %vm411 = vcmp.eq.s32.totalorder %v235, %v360
        %vm412 = vcmp.eq.s32.totalorder %v236, %v360
        %vm413 = vcmp.eq.s32.totalorder %v233, %v363
        %vm414 = vcmp.eq.s32.totalorder %v234, %v363
        %vm415 = vcmp.eq.s32.totalorder %v235, %v363
        %vm416 = vcmp.eq.s32.totalorder %v236, %v363
        %vm417 = vcmp.eq.s32.totalorder %v233, %v366
        %vm418 = vcmp.eq.s32.totalorder %v234, %v366
        %vm419 = vcmp.eq.s32.totalorder %v235, %v366
        %vm420 = vcmp.eq.s32.totalorder %v236, %v366
        %vm421 = vcmp.eq.s32.totalorder %v233, %v369
        %vm422 = vcmp.eq.s32.totalorder %v234, %v369
        %vm423 = vcmp.eq.s32.totalorder %v235, %v369
        %vm424 = vcmp.eq.s32.totalorder %v236, %v369
        %vm425 = vcmp.eq.s32.totalorder %v233, %v372
        %vm426 = vcmp.eq.s32.totalorder %v234, %v372
        %vm427 = vcmp.eq.s32.totalorder %v235, %v372
        %vm428 = vcmp.eq.s32.totalorder %v236, %v372
        %vm429 = vcmp.eq.s32.totalorder %v233, %v375
        %vm430 = vcmp.eq.s32.totalorder %v234, %v375
        %vm431 = vcmp.eq.s32.totalorder %v235, %v375
        %vm432 = vcmp.eq.s32.totalorder %v236, %v375
        %vm433 = vcmp.eq.s32.totalorder %v233, %v378
        %vm434 = vcmp.eq.s32.totalorder %v234, %v378
        %vm435 = vcmp.eq.s32.totalorder %v235, %v378
        %vm436 = vcmp.eq.s32.totalorder %v236, %v378
        %vm437 = vcmp.eq.s32.totalorder %v233, %v381
        %vm438 = vcmp.eq.s32.totalorder %v234, %v381
        %vm439 = vcmp.eq.s32.totalorder %v235, %v381
        %vm440 = vcmp.eq.s32.totalorder %v236, %v381
        %vm441 = vcmp.eq.s32.totalorder %v233, %v384
        %vm442 = vcmp.eq.s32.totalorder %v234, %v384
        %vm443 = vcmp.eq.s32.totalorder %v235, %v384
        %vm444 = vcmp.eq.s32.totalorder %v236, %v384
        %vm445 = vcmp.eq.s32.totalorder %v233, %v387
        %vm446 = vcmp.eq.s32.totalorder %v234, %v387
        %vm447 = vcmp.eq.s32.totalorder %v235, %v387
        %vm448 = vcmp.eq.s32.totalorder %v236, %v387
        %vm449 = vcmp.eq.s32.totalorder %v233, %v390
        %vm450 = vcmp.eq.s32.totalorder %v234, %v390
        %vm451 = vcmp.eq.s32.totalorder %v235, %v390
        %vm452 = vcmp.eq.s32.totalorder %v236, %v390
        %vm453 = vcmp.eq.s32.totalorder %v233, %v393
        %vm454 = vcmp.eq.s32.totalorder %v234, %v393
        %vm455 = vcmp.eq.s32.totalorder %v235, %v393
        %vm456 = vcmp.eq.s32.totalorder %v236, %v393
        %vm457 = vcmp.eq.s32.totalorder %v233, %v396
        %vm458 = vcmp.eq.s32.totalorder %v234, %v396
        %vm459 = vcmp.eq.s32.totalorder %v235, %v396
        %vm460 = vcmp.eq.s32.totalorder %v236, %v396
        %vm461 = vmor %vm285, %vm397
        %vm462 = vmor %vm286, %vm398
        %vm463 = vmor %vm287, %vm399
        %vm464 = vmor %vm288, %vm400
        %vm465 = vmor %vm289, %vm401
        %vm466 = vmor %vm290, %vm402
        %vm467 = vmor %vm291, %vm403
        %vm468 = vmor %vm292, %vm404
        %vm469 = vmor %vm293, %vm405
        %vm470 = vmor %vm294, %vm406
        %vm471 = vmor %vm295, %vm407
        %vm472 = vmor %vm296, %vm408
        %vm473 = vmor %vm297, %vm409
        %vm474 = vmor %vm298, %vm410
        %vm475 = vmor %vm299, %vm411
        %vm476 = vmor %vm300, %vm412
        %vm477 = vmor %vm301, %vm413
        %vm478 = vmor %vm302, %vm414
        %vm479 = vmor %vm303, %vm415
        %vm480 = vmor %vm304, %vm416
        %vm481 = vmor %vm305, %vm417
        %vm482 = vmor %vm306, %vm418
        %vm483 = vmor %vm307, %vm419
        %vm484 = vmor %vm308, %vm420
        %vm485 = vmor %vm309, %vm421
        %vm486 = vmor %vm310, %vm422
        %vm487 = vmor %vm311, %vm423
        %vm488 = vmor %vm312, %vm424
        %vm489 = vmor %vm313, %vm425
        %vm490 = vmor %vm314, %vm426
        %vm491 = vmor %vm315, %vm427
        %vm492 = vmor %vm316, %vm428
        %vm493 = vmor %vm317, %vm429
        %vm494 = vmor %vm318, %vm430
        %vm495 = vmor %vm319, %vm431
        %vm496 = vmor %vm320, %vm432
        %vm497 = vmor %vm321, %vm433
        %vm498 = vmor %vm322, %vm434
        %vm499 = vmor %vm323, %vm435
        %vm500 = vmor %vm324, %vm436
        %vm501 = vmor %vm325, %vm437
        %vm502 = vmor %vm326, %vm438
        %vm503 = vmor %vm327, %vm439
        %vm504 = vmor %vm328, %vm440
        %vm505 = vmor %vm329, %vm441
        %vm506 = vmor %vm330, %vm442
        %vm507 = vmor %vm331, %vm443
        %vm508 = vmor %vm332, %vm444
        %vm509 = vmor %vm333, %vm445
        %vm510 = vmor %vm334, %vm446
        %vm511 = vmor %vm335, %vm447
        %vm512 = vmor %vm336, %vm448
        %vm513 = vmor %vm337, %vm449
        %vm514 = vmor %vm338, %vm450
        %vm515 = vmor %vm339, %vm451
        %vm516 = vmor %vm340, %vm452
        %vm517 = vmor %vm341, %vm453
        %vm518 = vmor %vm342, %vm454
        %vm519 = vmor %vm343, %vm455
        %vm520 = vmor %vm344, %vm456
        %vm521 = vmor %vm345, %vm457
        %vm522 = vmor %vm346, %vm458
        %vm523 = vmor %vm347, %vm459
        %vm524 = vmor %vm348, %vm460
        %525 = vset.pattern.permute.xlu0 2
        %526 = vperm.xlu0 %525, %v216
        %v527 = vpop.permute.xlu0 %526
        %528 = vset.pattern.permute.xlu0 2
        %529 = vperm.xlu0 %528, %v217
        %v530 = vpop.permute.xlu0 %529
        %531 = vset.pattern.permute.xlu0 2
        %532 = vperm.xlu0 %531, %v218
        %v533 = vpop.permute.xlu0 %532
        %534 = vset.pattern.permute.xlu0 2
        %535 = vperm.xlu0 %534, %v219
        %v536 = vpop.permute.xlu0 %535
        %537 = vset.pattern.permute.xlu0 2
        %538 = vperm.xlu0 %537, %v220
        %v539 = vpop.permute.xlu0 %538
        %540 = vset.pattern.permute.xlu0 2
        %541 = vperm.xlu0 %540, %v221
        %v542 = vpop.permute.xlu0 %541
        %543 = vset.pattern.permute.xlu0 2
        %544 = vperm.xlu0 %543, %v222
        %v545 = vpop.permute.xlu0 %544
        %546 = vset.pattern.permute.xlu0 2
        %547 = vperm.xlu0 %546, %v223
        %v548 = vpop.permute.xlu0 %547
        %549 = vset.pattern.permute.xlu0 2
        %550 = vperm.xlu0 %549, %v224
        %v551 = vpop.permute.xlu0 %550
        %552 = vset.pattern.permute.xlu0 2
        %553 = vperm.xlu0 %552, %v225
        %v554 = vpop.permute.xlu0 %553
        %555 = vset.pattern.permute.xlu0 2
        %556 = vperm.xlu0 %555, %v226
        %v557 = vpop.permute.xlu0 %556
        %558 = vset.pattern.permute.xlu0 2
        %559 = vperm.xlu0 %558, %v227
        %v560 = vpop.permute.xlu0 %559
        %561 = vset.pattern.permute.xlu0 2
        %562 = vperm.xlu0 %561, %v228
        %v563 = vpop.permute.xlu0 %562
        %564 = vset.pattern.permute.xlu0 2
        %565 = vperm.xlu0 %564, %v229
        %v566 = vpop.permute.xlu0 %565
        %567 = vset.pattern.permute.xlu0 2
        %568 = vperm.xlu0 %567, %v230
        %v569 = vpop.permute.xlu0 %568
        %570 = vset.pattern.permute.xlu0 2
        %571 = vperm.xlu0 %570, %v231
        %v572 = vpop.permute.xlu0 %571
        %vm573 = vcmp.eq.s32.totalorder %v233, %v527
        %vm574 = vcmp.eq.s32.totalorder %v234, %v527
        %vm575 = vcmp.eq.s32.totalorder %v235, %v527
        %vm576 = vcmp.eq.s32.totalorder %v236, %v527
        %vm577 = vcmp.eq.s32.totalorder %v233, %v530
        %vm578 = vcmp.eq.s32.totalorder %v234, %v530
        %vm579 = vcmp.eq.s32.totalorder %v235, %v530
        %vm580 = vcmp.eq.s32.totalorder %v236, %v530
        %vm581 = vcmp.eq.s32.totalorder %v233, %v533
        %vm582 = vcmp.eq.s32.totalorder %v234, %v533
        %vm583 = vcmp.eq.s32.totalorder %v235, %v533
        %vm584 = vcmp.eq.s32.totalorder %v236, %v533
        %vm585 = vcmp.eq.s32.totalorder %v233, %v536
        %vm586 = vcmp.eq.s32.totalorder %v234, %v536
        %vm587 = vcmp.eq.s32.totalorder %v235, %v536
        %vm588 = vcmp.eq.s32.totalorder %v236, %v536
        %vm589 = vcmp.eq.s32.totalorder %v233, %v539
        %vm590 = vcmp.eq.s32.totalorder %v234, %v539
        %vm591 = vcmp.eq.s32.totalorder %v235, %v539
        %vm592 = vcmp.eq.s32.totalorder %v236, %v539
        %vm593 = vcmp.eq.s32.totalorder %v233, %v542
        %vm594 = vcmp.eq.s32.totalorder %v234, %v542
        %vm595 = vcmp.eq.s32.totalorder %v235, %v542
        %vm596 = vcmp.eq.s32.totalorder %v236, %v542
        %vm597 = vcmp.eq.s32.totalorder %v233, %v545
        %vm598 = vcmp.eq.s32.totalorder %v234, %v545
        %vm599 = vcmp.eq.s32.totalorder %v235, %v545
        %vm600 = vcmp.eq.s32.totalorder %v236, %v545
        %vm601 = vcmp.eq.s32.totalorder %v233, %v548
        %vm602 = vcmp.eq.s32.totalorder %v234, %v548
        %vm603 = vcmp.eq.s32.totalorder %v235, %v548
        %vm604 = vcmp.eq.s32.totalorder %v236, %v548
        %vm605 = vcmp.eq.s32.totalorder %v233, %v551
        %vm606 = vcmp.eq.s32.totalorder %v234, %v551
        %vm607 = vcmp.eq.s32.totalorder %v235, %v551
        %vm608 = vcmp.eq.s32.totalorder %v236, %v551
        %vm609 = vcmp.eq.s32.totalorder %v233, %v554
        %vm610 = vcmp.eq.s32.totalorder %v234, %v554
        %vm611 = vcmp.eq.s32.totalorder %v235, %v554
        %vm612 = vcmp.eq.s32.totalorder %v236, %v554
        %vm613 = vcmp.eq.s32.totalorder %v233, %v557
        %vm614 = vcmp.eq.s32.totalorder %v234, %v557
        %vm615 = vcmp.eq.s32.totalorder %v235, %v557
        %vm616 = vcmp.eq.s32.totalorder %v236, %v557
        %vm617 = vcmp.eq.s32.totalorder %v233, %v560
        %vm618 = vcmp.eq.s32.totalorder %v234, %v560
        %vm619 = vcmp.eq.s32.totalorder %v235, %v560
        %vm620 = vcmp.eq.s32.totalorder %v236, %v560
        %vm621 = vcmp.eq.s32.totalorder %v233, %v563
        %vm622 = vcmp.eq.s32.totalorder %v234, %v563
        %vm623 = vcmp.eq.s32.totalorder %v235, %v563
        %vm624 = vcmp.eq.s32.totalorder %v236, %v563
        %vm625 = vcmp.eq.s32.totalorder %v233, %v566
        %vm626 = vcmp.eq.s32.totalorder %v234, %v566
        %vm627 = vcmp.eq.s32.totalorder %v235, %v566
        %vm628 = vcmp.eq.s32.totalorder %v236, %v566
        %vm629 = vcmp.eq.s32.totalorder %v233, %v569
        %vm630 = vcmp.eq.s32.totalorder %v234, %v569
        %vm631 = vcmp.eq.s32.totalorder %v235, %v569
        %vm632 = vcmp.eq.s32.totalorder %v236, %v569
        %vm633 = vcmp.eq.s32.totalorder %v233, %v572
        %vm634 = vcmp.eq.s32.totalorder %v234, %v572
        %vm635 = vcmp.eq.s32.totalorder %v235, %v572
        %vm636 = vcmp.eq.s32.totalorder %v236, %v572
        %vm637 = vmor %vm461, %vm573
        %vm638 = vmor %vm462, %vm574
        %vm639 = vmor %vm463, %vm575
        %vm640 = vmor %vm464, %vm576
        %vm641 = vmor %vm465, %vm577
        %vm642 = vmor %vm466, %vm578
        %vm643 = vmor %vm467, %vm579
        %vm644 = vmor %vm468, %vm580
        %vm645 = vmor %vm469, %vm581
        %vm646 = vmor %vm470, %vm582
        %vm647 = vmor %vm471, %vm583
        %vm648 = vmor %vm472, %vm584
        %vm649 = vmor %vm473, %vm585
        %vm650 = vmor %vm474, %vm586
        %vm651 = vmor %vm475, %vm587
        %vm652 = vmor %vm476, %vm588
        %vm653 = vmor %vm477, %vm589
        %vm654 = vmor %vm478, %vm590
        %vm655 = vmor %vm479, %vm591
        %vm656 = vmor %vm480, %vm592
        %vm657 = vmor %vm481, %vm593
        %vm658 = vmor %vm482, %vm594
        %vm659 = vmor %vm483, %vm595
        %vm660 = vmor %vm484, %vm596
        %vm661 = vmor %vm485, %vm597
        %vm662 = vmor %vm486, %vm598
        %vm663 = vmor %vm487, %vm599
        %vm664 = vmor %vm488, %vm600
        %vm665 = vmor %vm489, %vm601
        %vm666 = vmor %vm490, %vm602
        %vm667 = vmor %vm491, %vm603
        %vm668 = vmor %vm492, %vm604
        %vm669 = vmor %vm493, %vm605
        %vm670 = vmor %vm494, %vm606
        %vm671 = vmor %vm495, %vm607
        %vm672 = vmor %vm496, %vm608
        %vm673 = vmor %vm497, %vm609
        %vm674 = vmor %vm498, %vm610
        %vm675 = vmor %vm499, %vm611
        %vm676 = vmor %vm500, %vm612
        %vm677 = vmor %vm501, %vm613
        %vm678 = vmor %vm502, %vm614
        %vm679 = vmor %vm503, %vm615
        %vm680 = vmor %vm504, %vm616
        %vm681 = vmor %vm505, %vm617
        %vm682 = vmor %vm506, %vm618
        %vm683 = vmor %vm507, %vm619
        %vm684 = vmor %vm508, %vm620
        %vm685 = vmor %vm509, %vm621
        %vm686 = vmor %vm510, %vm622
        %vm687 = vmor %vm511, %vm623
        %vm688 = vmor %vm512, %vm624
        %vm689 = vmor %vm513, %vm625
        %vm690 = vmor %vm514, %vm626
        %vm691 = vmor %vm515, %vm627
        %vm692 = vmor %vm516, %vm628
        %vm693 = vmor %vm517, %vm629
        %vm694 = vmor %vm518, %vm630
        %vm695 = vmor %vm519, %vm631
        %vm696 = vmor %vm520, %vm632
        %vm697 = vmor %vm521, %vm633
        %vm698 = vmor %vm522, %vm634
        %vm699 = vmor %vm523, %vm635
        %vm700 = vmor %vm524, %vm636
        %701 = vset.pattern.permute.xlu0 3
        %702 = vperm.xlu0 %701, %v216
        %v703 = vpop.permute.xlu0 %702
        %704 = vset.pattern.permute.xlu0 3
        %705 = vperm.xlu0 %704, %v217
        %v706 = vpop.permute.xlu0 %705
        %707 = vset.pattern.permute.xlu0 3
        %708 = vperm.xlu0 %707, %v218
        %v709 = vpop.permute.xlu0 %708
        %710 = vset.pattern.permute.xlu0 3
        %711 = vperm.xlu0 %710, %v219
        %v712 = vpop.permute.xlu0 %711
        %713 = vset.pattern.permute.xlu0 3
        %714 = vperm.xlu0 %713, %v220
        %v715 = vpop.permute.xlu0 %714
        %716 = vset.pattern.permute.xlu0 3
        %717 = vperm.xlu0 %716, %v221
        %v718 = vpop.permute.xlu0 %717
        %719 = vset.pattern.permute.xlu0 3
        %720 = vperm.xlu0 %719, %v222
        %v721 = vpop.permute.xlu0 %720
        %722 = vset.pattern.permute.xlu0 3
        %723 = vperm.xlu0 %722, %v223
        %v724 = vpop.permute.xlu0 %723
        %725 = vset.pattern.permute.xlu0 3
        %726 = vperm.xlu0 %725, %v224
        %v727 = vpop.permute.xlu0 %726
        %728 = vset.pattern.permute.xlu0 3
        %729 = vperm.xlu0 %728, %v225
        %v730 = vpop.permute.xlu0 %729
        %731 = vset.pattern.permute.xlu0 3
        %732 = vperm.xlu0 %731, %v226
        %v733 = vpop.permute.xlu0 %732
        %734 = vset.pattern.permute.xlu0 3
        %735 = vperm.xlu0 %734, %v227
        %v736 = vpop.permute.xlu0 %735
        %737 = vset.pattern.permute.xlu0 3
        %738 = vperm.xlu0 %737, %v228
        %v739 = vpop.permute.xlu0 %738
        %740 = vset.pattern.permute.xlu0 3
        %741 = vperm.xlu0 %740, %v229
        %v742 = vpop.permute.xlu0 %741
        %743 = vset.pattern.permute.xlu0 3
        %744 = vperm.xlu0 %743, %v230
        %v745 = vpop.permute.xlu0 %744
        %746 = vset.pattern.permute.xlu0 3
        %747 = vperm.xlu0 %746, %v231
        %v748 = vpop.permute.xlu0 %747
        %vm749 = vcmp.eq.s32.totalorder %v233, %v703
        %vm750 = vcmp.eq.s32.totalorder %v234, %v703
        %vm751 = vcmp.eq.s32.totalorder %v235, %v703
        %vm752 = vcmp.eq.s32.totalorder %v236, %v703
        %vm753 = vcmp.eq.s32.totalorder %v233, %v706
        %vm754 = vcmp.eq.s32.totalorder %v234, %v706
        %vm755 = vcmp.eq.s32.totalorder %v235, %v706
        %vm756 = vcmp.eq.s32.totalorder %v236, %v706
        %vm757 = vcmp.eq.s32.totalorder %v233, %v709
        %vm758 = vcmp.eq.s32.totalorder %v234, %v709
        %vm759 = vcmp.eq.s32.totalorder %v235, %v709
        %vm760 = vcmp.eq.s32.totalorder %v236, %v709
        %vm761 = vcmp.eq.s32.totalorder %v233, %v712
        %vm762 = vcmp.eq.s32.totalorder %v234, %v712
        %vm763 = vcmp.eq.s32.totalorder %v235, %v712
        %vm764 = vcmp.eq.s32.totalorder %v236, %v712
        %vm765 = vcmp.eq.s32.totalorder %v233, %v715
        %vm766 = vcmp.eq.s32.totalorder %v234, %v715
        %vm767 = vcmp.eq.s32.totalorder %v235, %v715
        %vm768 = vcmp.eq.s32.totalorder %v236, %v715
        %vm769 = vcmp.eq.s32.totalorder %v233, %v718
        %vm770 = vcmp.eq.s32.totalorder %v234, %v718
        %vm771 = vcmp.eq.s32.totalorder %v235, %v718
        %vm772 = vcmp.eq.s32.totalorder %v236, %v718
        %vm773 = vcmp.eq.s32.totalorder %v233, %v721
        %vm774 = vcmp.eq.s32.totalorder %v234, %v721
        %vm775 = vcmp.eq.s32.totalorder %v235, %v721
        %vm776 = vcmp.eq.s32.totalorder %v236, %v721
        %vm777 = vcmp.eq.s32.totalorder %v233, %v724
        %vm778 = vcmp.eq.s32.totalorder %v234, %v724
        %vm779 = vcmp.eq.s32.totalorder %v235, %v724
        %vm780 = vcmp.eq.s32.totalorder %v236, %v724
        %vm781 = vcmp.eq.s32.totalorder %v233, %v727
        %vm782 = vcmp.eq.s32.totalorder %v234, %v727
        %vm783 = vcmp.eq.s32.totalorder %v235, %v727
        %vm784 = vcmp.eq.s32.totalorder %v236, %v727
        %vm785 = vcmp.eq.s32.totalorder %v233, %v730
        %vm786 = vcmp.eq.s32.totalorder %v234, %v730
        %vm787 = vcmp.eq.s32.totalorder %v235, %v730
        %vm788 = vcmp.eq.s32.totalorder %v236, %v730
        %vm789 = vcmp.eq.s32.totalorder %v233, %v733
        %vm790 = vcmp.eq.s32.totalorder %v234, %v733
        %vm791 = vcmp.eq.s32.totalorder %v235, %v733
        %vm792 = vcmp.eq.s32.totalorder %v236, %v733
        %vm793 = vcmp.eq.s32.totalorder %v233, %v736
        %vm794 = vcmp.eq.s32.totalorder %v234, %v736
        %vm795 = vcmp.eq.s32.totalorder %v235, %v736
        %vm796 = vcmp.eq.s32.totalorder %v236, %v736
        %vm797 = vcmp.eq.s32.totalorder %v233, %v739
        %vm798 = vcmp.eq.s32.totalorder %v234, %v739
        %vm799 = vcmp.eq.s32.totalorder %v235, %v739
        %vm800 = vcmp.eq.s32.totalorder %v236, %v739
        %vm801 = vcmp.eq.s32.totalorder %v233, %v742
        %vm802 = vcmp.eq.s32.totalorder %v234, %v742
        %vm803 = vcmp.eq.s32.totalorder %v235, %v742
        %vm804 = vcmp.eq.s32.totalorder %v236, %v742
        %vm805 = vcmp.eq.s32.totalorder %v233, %v745
        %vm806 = vcmp.eq.s32.totalorder %v234, %v745
        %vm807 = vcmp.eq.s32.totalorder %v235, %v745
        %vm808 = vcmp.eq.s32.totalorder %v236, %v745
        %vm809 = vcmp.eq.s32.totalorder %v233, %v748
        %vm810 = vcmp.eq.s32.totalorder %v234, %v748
        %vm811 = vcmp.eq.s32.totalorder %v235, %v748
        %vm812 = vcmp.eq.s32.totalorder %v236, %v748
        %vm813 = vmor %vm637, %vm749
        %vm814 = vmor %vm638, %vm750
        %vm815 = vmor %vm639, %vm751
        %vm816 = vmor %vm640, %vm752
        %vm817 = vmor %vm641, %vm753
        %vm818 = vmor %vm642, %vm754
        %vm819 = vmor %vm643, %vm755
        %vm820 = vmor %vm644, %vm756
        %vm821 = vmor %vm645, %vm757
        %vm822 = vmor %vm646, %vm758
        %vm823 = vmor %vm647, %vm759
        %vm824 = vmor %vm648, %vm760
        %vm825 = vmor %vm649, %vm761
        %vm826 = vmor %vm650, %vm762
        %vm827 = vmor %vm651, %vm763
        %vm828 = vmor %vm652, %vm764
        %vm829 = vmor %vm653, %vm765
        %vm830 = vmor %vm654, %vm766
        %vm831 = vmor %vm655, %vm767
        %vm832 = vmor %vm656, %vm768
        %vm833 = vmor %vm657, %vm769
        %vm834 = vmor %vm658, %vm770
        %vm835 = vmor %vm659, %vm771
        %vm836 = vmor %vm660, %vm772
        %vm837 = vmor %vm661, %vm773
        %vm838 = vmor %vm662, %vm774
        %vm839 = vmor %vm663, %vm775
        %vm840 = vmor %vm664, %vm776
        %vm841 = vmor %vm665, %vm777
        %vm842 = vmor %vm666, %vm778
        %vm843 = vmor %vm667, %vm779
        %vm844 = vmor %vm668, %vm780
        %vm845 = vmor %vm669, %vm781
        %vm846 = vmor %vm670, %vm782
        %vm847 = vmor %vm671, %vm783
        %vm848 = vmor %vm672, %vm784
        %vm849 = vmor %vm673, %vm785
        %vm850 = vmor %vm674, %vm786
        %vm851 = vmor %vm675, %vm787
        %vm852 = vmor %vm676, %vm788
        %vm853 = vmor %vm677, %vm789
        %vm854 = vmor %vm678, %vm790
        %vm855 = vmor %vm679, %vm791
        %vm856 = vmor %vm680, %vm792
        %vm857 = vmor %vm681, %vm793
        %vm858 = vmor %vm682, %vm794
        %vm859 = vmor %vm683, %vm795
        %vm860 = vmor %vm684, %vm796
        %vm861 = vmor %vm685, %vm797
        %vm862 = vmor %vm686, %vm798
        %vm863 = vmor %vm687, %vm799
        %vm864 = vmor %vm688, %vm800
        %vm865 = vmor %vm689, %vm801
        %vm866 = vmor %vm690, %vm802
        %vm867 = vmor %vm691, %vm803
        %vm868 = vmor %vm692, %vm804
        %vm869 = vmor %vm693, %vm805
        %vm870 = vmor %vm694, %vm806
        %vm871 = vmor %vm695, %vm807
        %vm872 = vmor %vm696, %vm808
        %vm873 = vmor %vm697, %vm809
        %vm874 = vmor %vm698, %vm810
        %vm875 = vmor %vm699, %vm811
        %vm876 = vmor %vm700, %vm812
        %877 = vset.pattern.permute.xlu0 4
        %878 = vperm.xlu0 %877, %v216
        %v879 = vpop.permute.xlu0 %878
        %880 = vset.pattern.permute.xlu0 4
        %881 = vperm.xlu0 %880, %v217
        %v882 = vpop.permute.xlu0 %881
        %883 = vset.pattern.permute.xlu0 4
        %884 = vperm.xlu0 %883, %v218
        %v885 = vpop.permute.xlu0 %884
        %886 = vset.pattern.permute.xlu0 4
        %887 = vperm.xlu0 %886, %v219
        %v888 = vpop.permute.xlu0 %887
        %889 = vset.pattern.permute.xlu0 4
        %890 = vperm.xlu0 %889, %v220
        %v891 = vpop.permute.xlu0 %890
        %892 = vset.pattern.permute.xlu0 4
        %893 = vperm.xlu0 %892, %v221
        %v894 = vpop.permute.xlu0 %893
        %895 = vset.pattern.permute.xlu0 4
        %896 = vperm.xlu0 %895, %v222
        %v897 = vpop.permute.xlu0 %896
        %898 = vset.pattern.permute.xlu0 4
        %899 = vperm.xlu0 %898, %v223
        %v900 = vpop.permute.xlu0 %899
        %901 = vset.pattern.permute.xlu0 4
        %902 = vperm.xlu0 %901, %v224
        %v903 = vpop.permute.xlu0 %902
        %904 = vset.pattern.permute.xlu0 4
        %905 = vperm.xlu0 %904, %v225
        %v906 = vpop.permute.xlu0 %905
        %907 = vset.pattern.permute.xlu0 4
        %908 = vperm.xlu0 %907, %v226
        %v909 = vpop.permute.xlu0 %908
        %910 = vset.pattern.permute.xlu0 4
        %911 = vperm.xlu0 %910, %v227
        %v912 = vpop.permute.xlu0 %911
        %913 = vset.pattern.permute.xlu0 4
        %914 = vperm.xlu0 %913, %v228
        %v915 = vpop.permute.xlu0 %914
        %916 = vset.pattern.permute.xlu0 4
        %917 = vperm.xlu0 %916, %v229
        %v918 = vpop.permute.xlu0 %917
        %919 = vset.pattern.permute.xlu0 4
        %920 = vperm.xlu0 %919, %v230
        %v921 = vpop.permute.xlu0 %920
        %922 = vset.pattern.permute.xlu0 4
        %923 = vperm.xlu0 %922, %v231
        %v924 = vpop.permute.xlu0 %923
        %vm925 = vcmp.eq.s32.totalorder %v233, %v879
        %vm926 = vcmp.eq.s32.totalorder %v234, %v879
        %vm927 = vcmp.eq.s32.totalorder %v235, %v879
        %vm928 = vcmp.eq.s32.totalorder %v236, %v879
        %vm929 = vcmp.eq.s32.totalorder %v233, %v882
        %vm930 = vcmp.eq.s32.totalorder %v234, %v882
        %vm931 = vcmp.eq.s32.totalorder %v235, %v882
        %vm932 = vcmp.eq.s32.totalorder %v236, %v882
        %vm933 = vcmp.eq.s32.totalorder %v233, %v885
        %vm934 = vcmp.eq.s32.totalorder %v234, %v885
        %vm935 = vcmp.eq.s32.totalorder %v235, %v885
        %vm936 = vcmp.eq.s32.totalorder %v236, %v885
        %vm937 = vcmp.eq.s32.totalorder %v233, %v888
        %vm938 = vcmp.eq.s32.totalorder %v234, %v888
        %vm939 = vcmp.eq.s32.totalorder %v235, %v888
        %vm940 = vcmp.eq.s32.totalorder %v236, %v888
        %vm941 = vcmp.eq.s32.totalorder %v233, %v891
        %vm942 = vcmp.eq.s32.totalorder %v234, %v891
        %vm943 = vcmp.eq.s32.totalorder %v235, %v891
        %vm944 = vcmp.eq.s32.totalorder %v236, %v891
        %vm945 = vcmp.eq.s32.totalorder %v233, %v894
        %vm946 = vcmp.eq.s32.totalorder %v234, %v894
        %vm947 = vcmp.eq.s32.totalorder %v235, %v894
        %vm948 = vcmp.eq.s32.totalorder %v236, %v894
        %vm949 = vcmp.eq.s32.totalorder %v233, %v897
        %vm950 = vcmp.eq.s32.totalorder %v234, %v897
        %vm951 = vcmp.eq.s32.totalorder %v235, %v897
        %vm952 = vcmp.eq.s32.totalorder %v236, %v897
        %vm953 = vcmp.eq.s32.totalorder %v233, %v900
        %vm954 = vcmp.eq.s32.totalorder %v234, %v900
        %vm955 = vcmp.eq.s32.totalorder %v235, %v900
        %vm956 = vcmp.eq.s32.totalorder %v236, %v900
        %vm957 = vcmp.eq.s32.totalorder %v233, %v903
        %vm958 = vcmp.eq.s32.totalorder %v234, %v903
        %vm959 = vcmp.eq.s32.totalorder %v235, %v903
        %vm960 = vcmp.eq.s32.totalorder %v236, %v903
        %vm961 = vcmp.eq.s32.totalorder %v233, %v906
        %vm962 = vcmp.eq.s32.totalorder %v234, %v906
        %vm963 = vcmp.eq.s32.totalorder %v235, %v906
        %vm964 = vcmp.eq.s32.totalorder %v236, %v906
        %vm965 = vcmp.eq.s32.totalorder %v233, %v909
        %vm966 = vcmp.eq.s32.totalorder %v234, %v909
        %vm967 = vcmp.eq.s32.totalorder %v235, %v909
        %vm968 = vcmp.eq.s32.totalorder %v236, %v909
        %vm969 = vcmp.eq.s32.totalorder %v233, %v912
        %vm970 = vcmp.eq.s32.totalorder %v234, %v912
        %vm971 = vcmp.eq.s32.totalorder %v235, %v912
        %vm972 = vcmp.eq.s32.totalorder %v236, %v912
        %vm973 = vcmp.eq.s32.totalorder %v233, %v915
        %vm974 = vcmp.eq.s32.totalorder %v234, %v915
        %vm975 = vcmp.eq.s32.totalorder %v235, %v915
        %vm976 = vcmp.eq.s32.totalorder %v236, %v915
        %vm977 = vcmp.eq.s32.totalorder %v233, %v918
        %vm978 = vcmp.eq.s32.totalorder %v234, %v918
        %vm979 = vcmp.eq.s32.totalorder %v235, %v918
        %vm980 = vcmp.eq.s32.totalorder %v236, %v918
        %vm981 = vcmp.eq.s32.totalorder %v233, %v921
        %vm982 = vcmp.eq.s32.totalorder %v234, %v921
        %vm983 = vcmp.eq.s32.totalorder %v235, %v921
        %vm984 = vcmp.eq.s32.totalorder %v236, %v921
        %vm985 = vcmp.eq.s32.totalorder %v233, %v924
        %vm986 = vcmp.eq.s32.totalorder %v234, %v924
        %vm987 = vcmp.eq.s32.totalorder %v235, %v924
        %vm988 = vcmp.eq.s32.totalorder %v236, %v924
        %vm989 = vmor %vm813, %vm925
        %vm990 = vmor %vm814, %vm926
        %vm991 = vmor %vm815, %vm927
        %vm992 = vmor %vm816, %vm928
        %vm993 = vmor %vm817, %vm929
        %vm994 = vmor %vm818, %vm930
        %vm995 = vmor %vm819, %vm931
        %vm996 = vmor %vm820, %vm932
        %vm997 = vmor %vm821, %vm933
        %vm998 = vmor %vm822, %vm934
        %vm999 = vmor %vm823, %vm935
        %vm1000 = vmor %vm824, %vm936
        %vm1001 = vmor %vm825, %vm937
        %vm1002 = vmor %vm826, %vm938
        %vm1003 = vmor %vm827, %vm939
        %vm1004 = vmor %vm828, %vm940
        %vm1005 = vmor %vm829, %vm941
        %vm1006 = vmor %vm830, %vm942
        %vm1007 = vmor %vm831, %vm943
        %vm1008 = vmor %vm832, %vm944
        %vm1009 = vmor %vm833, %vm945
        %vm1010 = vmor %vm834, %vm946
        %vm1011 = vmor %vm835, %vm947
        %vm1012 = vmor %vm836, %vm948
        %vm1013 = vmor %vm837, %vm949
        %vm1014 = vmor %vm838, %vm950
        %vm1015 = vmor %vm839, %vm951
        %vm1016 = vmor %vm840, %vm952
        %vm1017 = vmor %vm841, %vm953
        %vm1018 = vmor %vm842, %vm954
        %vm1019 = vmor %vm843, %vm955
        %vm1020 = vmor %vm844, %vm956
        %vm1021 = vmor %vm845, %vm957
        %vm1022 = vmor %vm846, %vm958
        %vm1023 = vmor %vm847, %vm959
        %vm1024 = vmor %vm848, %vm960
        %vm1025 = vmor %vm849, %vm961
        %vm1026 = vmor %vm850, %vm962
        %vm1027 = vmor %vm851, %vm963
        %vm1028 = vmor %vm852, %vm964
        %vm1029 = vmor %vm853, %vm965
        %vm1030 = vmor %vm854, %vm966
        %vm1031 = vmor %vm855, %vm967
        %vm1032 = vmor %vm856, %vm968
        %vm1033 = vmor %vm857, %vm969
        %vm1034 = vmor %vm858, %vm970
        %vm1035 = vmor %vm859, %vm971
        %vm1036 = vmor %vm860, %vm972
        %vm1037 = vmor %vm861, %vm973
        %vm1038 = vmor %vm862, %vm974
        %vm1039 = vmor %vm863, %vm975
        %vm1040 = vmor %vm864, %vm976
        %vm1041 = vmor %vm865, %vm977
        %vm1042 = vmor %vm866, %vm978
        %vm1043 = vmor %vm867, %vm979
        %vm1044 = vmor %vm868, %vm980
        %vm1045 = vmor %vm869, %vm981
        %vm1046 = vmor %vm870, %vm982
        %vm1047 = vmor %vm871, %vm983
        %vm1048 = vmor %vm872, %vm984
        %vm1049 = vmor %vm873, %vm985
        %vm1050 = vmor %vm874, %vm986
        %vm1051 = vmor %vm875, %vm987
        %vm1052 = vmor %vm876, %vm988
        %1053 = vset.pattern.permute.xlu0 5
        %1054 = vperm.xlu0 %1053, %v216
        %v1055 = vpop.permute.xlu0 %1054
        %1056 = vset.pattern.permute.xlu0 5
        %1057 = vperm.xlu0 %1056, %v217
        %v1058 = vpop.permute.xlu0 %1057
        %1059 = vset.pattern.permute.xlu0 5
        %1060 = vperm.xlu0 %1059, %v218
        %v1061 = vpop.permute.xlu0 %1060
        %1062 = vset.pattern.permute.xlu0 5
        %1063 = vperm.xlu0 %1062, %v219
        %v1064 = vpop.permute.xlu0 %1063
        %1065 = vset.pattern.permute.xlu0 5
        %1066 = vperm.xlu0 %1065, %v220
        %v1067 = vpop.permute.xlu0 %1066
        %1068 = vset.pattern.permute.xlu0 5
        %1069 = vperm.xlu0 %1068, %v221
        %v1070 = vpop.permute.xlu0 %1069
        %1071 = vset.pattern.permute.xlu0 5
        %1072 = vperm.xlu0 %1071, %v222
        %v1073 = vpop.permute.xlu0 %1072
        %1074 = vset.pattern.permute.xlu0 5
        %1075 = vperm.xlu0 %1074, %v223
        %v1076 = vpop.permute.xlu0 %1075
        %1077 = vset.pattern.permute.xlu0 5
        %1078 = vperm.xlu0 %1077, %v224
        %v1079 = vpop.permute.xlu0 %1078
        %1080 = vset.pattern.permute.xlu0 5
        %1081 = vperm.xlu0 %1080, %v225
        %v1082 = vpop.permute.xlu0 %1081
        %1083 = vset.pattern.permute.xlu0 5
        %1084 = vperm.xlu0 %1083, %v226
        %v1085 = vpop.permute.xlu0 %1084
        %1086 = vset.pattern.permute.xlu0 5
        %1087 = vperm.xlu0 %1086, %v227
        %v1088 = vpop.permute.xlu0 %1087
        %1089 = vset.pattern.permute.xlu0 5
        %1090 = vperm.xlu0 %1089, %v228
        %v1091 = vpop.permute.xlu0 %1090
        %1092 = vset.pattern.permute.xlu0 5
        %1093 = vperm.xlu0 %1092, %v229
        %v1094 = vpop.permute.xlu0 %1093
        %1095 = vset.pattern.permute.xlu0 5
        %1096 = vperm.xlu0 %1095, %v230
        %v1097 = vpop.permute.xlu0 %1096
        %1098 = vset.pattern.permute.xlu0 5
        %1099 = vperm.xlu0 %1098, %v231
        %v1100 = vpop.permute.xlu0 %1099
        %vm1101 = vcmp.eq.s32.totalorder %v233, %v1055
        %vm1102 = vcmp.eq.s32.totalorder %v234, %v1055
        %vm1103 = vcmp.eq.s32.totalorder %v235, %v1055
        %vm1104 = vcmp.eq.s32.totalorder %v236, %v1055
        %vm1105 = vcmp.eq.s32.totalorder %v233, %v1058
        %vm1106 = vcmp.eq.s32.totalorder %v234, %v1058
        %vm1107 = vcmp.eq.s32.totalorder %v235, %v1058
        %vm1108 = vcmp.eq.s32.totalorder %v236, %v1058
        %vm1109 = vcmp.eq.s32.totalorder %v233, %v1061
        %vm1110 = vcmp.eq.s32.totalorder %v234, %v1061
        %vm1111 = vcmp.eq.s32.totalorder %v235, %v1061
        %vm1112 = vcmp.eq.s32.totalorder %v236, %v1061
        %vm1113 = vcmp.eq.s32.totalorder %v233, %v1064
        %vm1114 = vcmp.eq.s32.totalorder %v234, %v1064
        %vm1115 = vcmp.eq.s32.totalorder %v235, %v1064
        %vm1116 = vcmp.eq.s32.totalorder %v236, %v1064
        %vm1117 = vcmp.eq.s32.totalorder %v233, %v1067
        %vm1118 = vcmp.eq.s32.totalorder %v234, %v1067
        %vm1119 = vcmp.eq.s32.totalorder %v235, %v1067
        %vm1120 = vcmp.eq.s32.totalorder %v236, %v1067
        %vm1121 = vcmp.eq.s32.totalorder %v233, %v1070
        %vm1122 = vcmp.eq.s32.totalorder %v234, %v1070
        %vm1123 = vcmp.eq.s32.totalorder %v235, %v1070
        %vm1124 = vcmp.eq.s32.totalorder %v236, %v1070
        %vm1125 = vcmp.eq.s32.totalorder %v233, %v1073
        %vm1126 = vcmp.eq.s32.totalorder %v234, %v1073
        %vm1127 = vcmp.eq.s32.totalorder %v235, %v1073
        %vm1128 = vcmp.eq.s32.totalorder %v236, %v1073
        %vm1129 = vcmp.eq.s32.totalorder %v233, %v1076
        %vm1130 = vcmp.eq.s32.totalorder %v234, %v1076
        %vm1131 = vcmp.eq.s32.totalorder %v235, %v1076
        %vm1132 = vcmp.eq.s32.totalorder %v236, %v1076
        %vm1133 = vcmp.eq.s32.totalorder %v233, %v1079
        %vm1134 = vcmp.eq.s32.totalorder %v234, %v1079
        %vm1135 = vcmp.eq.s32.totalorder %v235, %v1079
        %vm1136 = vcmp.eq.s32.totalorder %v236, %v1079
        %vm1137 = vcmp.eq.s32.totalorder %v233, %v1082
        %vm1138 = vcmp.eq.s32.totalorder %v234, %v1082
        %vm1139 = vcmp.eq.s32.totalorder %v235, %v1082
        %vm1140 = vcmp.eq.s32.totalorder %v236, %v1082
        %vm1141 = vcmp.eq.s32.totalorder %v233, %v1085
        %vm1142 = vcmp.eq.s32.totalorder %v234, %v1085
        %vm1143 = vcmp.eq.s32.totalorder %v235, %v1085
        %vm1144 = vcmp.eq.s32.totalorder %v236, %v1085
        %vm1145 = vcmp.eq.s32.totalorder %v233, %v1088
        %vm1146 = vcmp.eq.s32.totalorder %v234, %v1088
        %vm1147 = vcmp.eq.s32.totalorder %v235, %v1088
        %vm1148 = vcmp.eq.s32.totalorder %v236, %v1088
        %vm1149 = vcmp.eq.s32.totalorder %v233, %v1091
        %vm1150 = vcmp.eq.s32.totalorder %v234, %v1091
        %vm1151 = vcmp.eq.s32.totalorder %v235, %v1091
        %vm1152 = vcmp.eq.s32.totalorder %v236, %v1091
        %vm1153 = vcmp.eq.s32.totalorder %v233, %v1094
        %vm1154 = vcmp.eq.s32.totalorder %v234, %v1094
        %vm1155 = vcmp.eq.s32.totalorder %v235, %v1094
        %vm1156 = vcmp.eq.s32.totalorder %v236, %v1094
        %vm1157 = vcmp.eq.s32.totalorder %v233, %v1097
        %vm1158 = vcmp.eq.s32.totalorder %v234, %v1097
        %vm1159 = vcmp.eq.s32.totalorder %v235, %v1097
        %vm1160 = vcmp.eq.s32.totalorder %v236, %v1097
        %vm1161 = vcmp.eq.s32.totalorder %v233, %v1100
        %vm1162 = vcmp.eq.s32.totalorder %v234, %v1100
        %vm1163 = vcmp.eq.s32.totalorder %v235, %v1100
        %vm1164 = vcmp.eq.s32.totalorder %v236, %v1100
        %vm1165 = vmor %vm989, %vm1101
        %vm1166 = vmor %vm990, %vm1102
        %vm1167 = vmor %vm991, %vm1103
        %vm1168 = vmor %vm992, %vm1104
        %vm1169 = vmor %vm993, %vm1105
        %vm1170 = vmor %vm994, %vm1106
        %vm1171 = vmor %vm995, %vm1107
        %vm1172 = vmor %vm996, %vm1108
        %vm1173 = vmor %vm997, %vm1109
        %vm1174 = vmor %vm998, %vm1110
        %vm1175 = vmor %vm999, %vm1111
        %vm1176 = vmor %vm1000, %vm1112
        %vm1177 = vmor %vm1001, %vm1113
        %vm1178 = vmor %vm1002, %vm1114
        %vm1179 = vmor %vm1003, %vm1115
        %vm1180 = vmor %vm1004, %vm1116
        %vm1181 = vmor %vm1005, %vm1117
        %vm1182 = vmor %vm1006, %vm1118
        %vm1183 = vmor %vm1007, %vm1119
        %vm1184 = vmor %vm1008, %vm1120
        %vm1185 = vmor %vm1009, %vm1121
        %vm1186 = vmor %vm1010, %vm1122
        %vm1187 = vmor %vm1011, %vm1123
        %vm1188 = vmor %vm1012, %vm1124
        %vm1189 = vmor %vm1013, %vm1125
        %vm1190 = vmor %vm1014, %vm1126
        %vm1191 = vmor %vm1015, %vm1127
        %vm1192 = vmor %vm1016, %vm1128
        %vm1193 = vmor %vm1017, %vm1129
        %vm1194 = vmor %vm1018, %vm1130
        %vm1195 = vmor %vm1019, %vm1131
        %vm1196 = vmor %vm1020, %vm1132
        %vm1197 = vmor %vm1021, %vm1133
        %vm1198 = vmor %vm1022, %vm1134
        %vm1199 = vmor %vm1023, %vm1135
        %vm1200 = vmor %vm1024, %vm1136
        %vm1201 = vmor %vm1025, %vm1137
        %vm1202 = vmor %vm1026, %vm1138
        %vm1203 = vmor %vm1027, %vm1139
        %vm1204 = vmor %vm1028, %vm1140
        %vm1205 = vmor %vm1029, %vm1141
        %vm1206 = vmor %vm1030, %vm1142
        %vm1207 = vmor %vm1031, %vm1143
        %vm1208 = vmor %vm1032, %vm1144
        %vm1209 = vmor %vm1033, %vm1145
        %vm1210 = vmor %vm1034, %vm1146
        %vm1211 = vmor %vm1035, %vm1147
        %vm1212 = vmor %vm1036, %vm1148
        %vm1213 = vmor %vm1037, %vm1149
        %vm1214 = vmor %vm1038, %vm1150
        %vm1215 = vmor %vm1039, %vm1151
        %vm1216 = vmor %vm1040, %vm1152
        %vm1217 = vmor %vm1041, %vm1153
        %vm1218 = vmor %vm1042, %vm1154
        %vm1219 = vmor %vm1043, %vm1155
        %vm1220 = vmor %vm1044, %vm1156
        %vm1221 = vmor %vm1045, %vm1157
        %vm1222 = vmor %vm1046, %vm1158
        %vm1223 = vmor %vm1047, %vm1159
        %vm1224 = vmor %vm1048, %vm1160
        %vm1225 = vmor %vm1049, %vm1161
        %vm1226 = vmor %vm1050, %vm1162
        %vm1227 = vmor %vm1051, %vm1163
        %vm1228 = vmor %vm1052, %vm1164
        %1229 = vset.pattern.permute.xlu0 6
        %1230 = vperm.xlu0 %1229, %v216
        %v1231 = vpop.permute.xlu0 %1230
        %1232 = vset.pattern.permute.xlu0 6
        %1233 = vperm.xlu0 %1232, %v217
        %v1234 = vpop.permute.xlu0 %1233
        %1235 = vset.pattern.permute.xlu0 6
        %1236 = vperm.xlu0 %1235, %v218
        %v1237 = vpop.permute.xlu0 %1236
        %1238 = vset.pattern.permute.xlu0 6
        %1239 = vperm.xlu0 %1238, %v219
        %v1240 = vpop.permute.xlu0 %1239
        %1241 = vset.pattern.permute.xlu0 6
        %1242 = vperm.xlu0 %1241, %v220
        %v1243 = vpop.permute.xlu0 %1242
        %1244 = vset.pattern.permute.xlu0 6
        %1245 = vperm.xlu0 %1244, %v221
        %v1246 = vpop.permute.xlu0 %1245
        %1247 = vset.pattern.permute.xlu0 6
        %1248 = vperm.xlu0 %1247, %v222
        %v1249 = vpop.permute.xlu0 %1248
        %1250 = vset.pattern.permute.xlu0 6
        %1251 = vperm.xlu0 %1250, %v223
        %v1252 = vpop.permute.xlu0 %1251
        %1253 = vset.pattern.permute.xlu0 6
        %1254 = vperm.xlu0 %1253, %v224
        %v1255 = vpop.permute.xlu0 %1254
        %1256 = vset.pattern.permute.xlu0 6
        %1257 = vperm.xlu0 %1256, %v225
        %v1258 = vpop.permute.xlu0 %1257
        %1259 = vset.pattern.permute.xlu0 6
        %1260 = vperm.xlu0 %1259, %v226
        %v1261 = vpop.permute.xlu0 %1260
        %1262 = vset.pattern.permute.xlu0 6
        %1263 = vperm.xlu0 %1262, %v227
        %v1264 = vpop.permute.xlu0 %1263
        %1265 = vset.pattern.permute.xlu0 6
        %1266 = vperm.xlu0 %1265, %v228
        %v1267 = vpop.permute.xlu0 %1266
        %1268 = vset.pattern.permute.xlu0 6
        %1269 = vperm.xlu0 %1268, %v229
        %v1270 = vpop.permute.xlu0 %1269
        %1271 = vset.pattern.permute.xlu0 6
        %1272 = vperm.xlu0 %1271, %v230
        %v1273 = vpop.permute.xlu0 %1272
        %1274 = vset.pattern.permute.xlu0 6
        %1275 = vperm.xlu0 %1274, %v231
        %v1276 = vpop.permute.xlu0 %1275
        %vm1277 = vcmp.eq.s32.totalorder %v233, %v1231
        %vm1278 = vcmp.eq.s32.totalorder %v234, %v1231
        %vm1279 = vcmp.eq.s32.totalorder %v235, %v1231
        %vm1280 = vcmp.eq.s32.totalorder %v236, %v1231
        %vm1281 = vcmp.eq.s32.totalorder %v233, %v1234
        %vm1282 = vcmp.eq.s32.totalorder %v234, %v1234
        %vm1283 = vcmp.eq.s32.totalorder %v235, %v1234
        %vm1284 = vcmp.eq.s32.totalorder %v236, %v1234
        %vm1285 = vcmp.eq.s32.totalorder %v233, %v1237
        %vm1286 = vcmp.eq.s32.totalorder %v234, %v1237
        %vm1287 = vcmp.eq.s32.totalorder %v235, %v1237
        %vm1288 = vcmp.eq.s32.totalorder %v236, %v1237
        %vm1289 = vcmp.eq.s32.totalorder %v233, %v1240
        %vm1290 = vcmp.eq.s32.totalorder %v234, %v1240
        %vm1291 = vcmp.eq.s32.totalorder %v235, %v1240
        %vm1292 = vcmp.eq.s32.totalorder %v236, %v1240
        %vm1293 = vcmp.eq.s32.totalorder %v233, %v1243
        %vm1294 = vcmp.eq.s32.totalorder %v234, %v1243
        %vm1295 = vcmp.eq.s32.totalorder %v235, %v1243
        %vm1296 = vcmp.eq.s32.totalorder %v236, %v1243
        %vm1297 = vcmp.eq.s32.totalorder %v233, %v1246
        %vm1298 = vcmp.eq.s32.totalorder %v234, %v1246
        %vm1299 = vcmp.eq.s32.totalorder %v235, %v1246
        %vm1300 = vcmp.eq.s32.totalorder %v236, %v1246
        %vm1301 = vcmp.eq.s32.totalorder %v233, %v1249
        %vm1302 = vcmp.eq.s32.totalorder %v234, %v1249
        %vm1303 = vcmp.eq.s32.totalorder %v235, %v1249
        %vm1304 = vcmp.eq.s32.totalorder %v236, %v1249
        %vm1305 = vcmp.eq.s32.totalorder %v233, %v1252
        %vm1306 = vcmp.eq.s32.totalorder %v234, %v1252
        %vm1307 = vcmp.eq.s32.totalorder %v235, %v1252
        %vm1308 = vcmp.eq.s32.totalorder %v236, %v1252
        %vm1309 = vcmp.eq.s32.totalorder %v233, %v1255
        %vm1310 = vcmp.eq.s32.totalorder %v234, %v1255
        %vm1311 = vcmp.eq.s32.totalorder %v235, %v1255
        %vm1312 = vcmp.eq.s32.totalorder %v236, %v1255
        %vm1313 = vcmp.eq.s32.totalorder %v233, %v1258
        %vm1314 = vcmp.eq.s32.totalorder %v234, %v1258
        %vm1315 = vcmp.eq.s32.totalorder %v235, %v1258
        %vm1316 = vcmp.eq.s32.totalorder %v236, %v1258
        %vm1317 = vcmp.eq.s32.totalorder %v233, %v1261
        %vm1318 = vcmp.eq.s32.totalorder %v234, %v1261
        %vm1319 = vcmp.eq.s32.totalorder %v235, %v1261
        %vm1320 = vcmp.eq.s32.totalorder %v236, %v1261
        %vm1321 = vcmp.eq.s32.totalorder %v233, %v1264
        %vm1322 = vcmp.eq.s32.totalorder %v234, %v1264
        %vm1323 = vcmp.eq.s32.totalorder %v235, %v1264
        %vm1324 = vcmp.eq.s32.totalorder %v236, %v1264
        %vm1325 = vcmp.eq.s32.totalorder %v233, %v1267
        %vm1326 = vcmp.eq.s32.totalorder %v234, %v1267
        %vm1327 = vcmp.eq.s32.totalorder %v235, %v1267
        %vm1328 = vcmp.eq.s32.totalorder %v236, %v1267
        %vm1329 = vcmp.eq.s32.totalorder %v233, %v1270
        %vm1330 = vcmp.eq.s32.totalorder %v234, %v1270
        %vm1331 = vcmp.eq.s32.totalorder %v235, %v1270
        %vm1332 = vcmp.eq.s32.totalorder %v236, %v1270
        %vm1333 = vcmp.eq.s32.totalorder %v233, %v1273
        %vm1334 = vcmp.eq.s32.totalorder %v234, %v1273
        %vm1335 = vcmp.eq.s32.totalorder %v235, %v1273
        %vm1336 = vcmp.eq.s32.totalorder %v236, %v1273
        %vm1337 = vcmp.eq.s32.totalorder %v233, %v1276
        %vm1338 = vcmp.eq.s32.totalorder %v234, %v1276
        %vm1339 = vcmp.eq.s32.totalorder %v235, %v1276
        %vm1340 = vcmp.eq.s32.totalorder %v236, %v1276
        %vm1341 = vmor %vm1165, %vm1277
        %vm1342 = vmor %vm1166, %vm1278
        %vm1343 = vmor %vm1167, %vm1279
        %vm1344 = vmor %vm1168, %vm1280
        %vm1345 = vmor %vm1169, %vm1281
        %vm1346 = vmor %vm1170, %vm1282
        %vm1347 = vmor %vm1171, %vm1283
        %vm1348 = vmor %vm1172, %vm1284
        %vm1349 = vmor %vm1173, %vm1285
        %vm1350 = vmor %vm1174, %vm1286
        %vm1351 = vmor %vm1175, %vm1287
        %vm1352 = vmor %vm1176, %vm1288
        %vm1353 = vmor %vm1177, %vm1289
        %vm1354 = vmor %vm1178, %vm1290
        %vm1355 = vmor %vm1179, %vm1291
        %vm1356 = vmor %vm1180, %vm1292
        %vm1357 = vmor %vm1181, %vm1293
        %vm1358 = vmor %vm1182, %vm1294
        %vm1359 = vmor %vm1183, %vm1295
        %vm1360 = vmor %vm1184, %vm1296
        %vm1361 = vmor %vm1185, %vm1297
        %vm1362 = vmor %vm1186, %vm1298
        %vm1363 = vmor %vm1187, %vm1299
        %vm1364 = vmor %vm1188, %vm1300
        %vm1365 = vmor %vm1189, %vm1301
        %vm1366 = vmor %vm1190, %vm1302
        %vm1367 = vmor %vm1191, %vm1303
        %vm1368 = vmor %vm1192, %vm1304
        %vm1369 = vmor %vm1193, %vm1305
        %vm1370 = vmor %vm1194, %vm1306
        %vm1371 = vmor %vm1195, %vm1307
        %vm1372 = vmor %vm1196, %vm1308
        %vm1373 = vmor %vm1197, %vm1309
        %vm1374 = vmor %vm1198, %vm1310
        %vm1375 = vmor %vm1199, %vm1311
        %vm1376 = vmor %vm1200, %vm1312
        %vm1377 = vmor %vm1201, %vm1313
        %vm1378 = vmor %vm1202, %vm1314
        %vm1379 = vmor %vm1203, %vm1315
        %vm1380 = vmor %vm1204, %vm1316
        %vm1381 = vmor %vm1205, %vm1317
        %vm1382 = vmor %vm1206, %vm1318
        %vm1383 = vmor %vm1207, %vm1319
        %vm1384 = vmor %vm1208, %vm1320
        %vm1385 = vmor %vm1209, %vm1321
        %vm1386 = vmor %vm1210, %vm1322
        %vm1387 = vmor %vm1211, %vm1323
        %vm1388 = vmor %vm1212, %vm1324
        %vm1389 = vmor %vm1213, %vm1325
        %vm1390 = vmor %vm1214, %vm1326
        %vm1391 = vmor %vm1215, %vm1327
        %vm1392 = vmor %vm1216, %vm1328
        %vm1393 = vmor %vm1217, %vm1329
        %vm1394 = vmor %vm1218, %vm1330
        %vm1395 = vmor %vm1219, %vm1331
        %vm1396 = vmor %vm1220, %vm1332
        %vm1397 = vmor %vm1221, %vm1333
        %vm1398 = vmor %vm1222, %vm1334
        %vm1399 = vmor %vm1223, %vm1335
        %vm1400 = vmor %vm1224, %vm1336
        %vm1401 = vmor %vm1225, %vm1337
        %vm1402 = vmor %vm1226, %vm1338
        %vm1403 = vmor %vm1227, %vm1339
        %vm1404 = vmor %vm1228, %vm1340
        %1405 = vset.pattern.permute.xlu0 7
        %1406 = vperm.xlu0 %1405, %v216
        %v1407 = vpop.permute.xlu0 %1406
        %1408 = vset.pattern.permute.xlu0 7
        %1409 = vperm.xlu0 %1408, %v217
        %v1410 = vpop.permute.xlu0 %1409
        %1411 = vset.pattern.permute.xlu0 7
        %1412 = vperm.xlu0 %1411, %v218
        %v1413 = vpop.permute.xlu0 %1412
        %1414 = vset.pattern.permute.xlu0 7
        %1415 = vperm.xlu0 %1414, %v219
        %v1416 = vpop.permute.xlu0 %1415
        %1417 = vset.pattern.permute.xlu0 7
        %1418 = vperm.xlu0 %1417, %v220
        %v1419 = vpop.permute.xlu0 %1418
        %1420 = vset.pattern.permute.xlu0 7
        %1421 = vperm.xlu0 %1420, %v221
        %v1422 = vpop.permute.xlu0 %1421
        %1423 = vset.pattern.permute.xlu0 7
        %1424 = vperm.xlu0 %1423, %v222
        %v1425 = vpop.permute.xlu0 %1424
        %1426 = vset.pattern.permute.xlu0 7
        %1427 = vperm.xlu0 %1426, %v223
        %v1428 = vpop.permute.xlu0 %1427
        %1429 = vset.pattern.permute.xlu0 7
        %1430 = vperm.xlu0 %1429, %v224
        %v1431 = vpop.permute.xlu0 %1430
        %1432 = vset.pattern.permute.xlu0 7
        %1433 = vperm.xlu0 %1432, %v225
        %v1434 = vpop.permute.xlu0 %1433
        %1435 = vset.pattern.permute.xlu0 7
        %1436 = vperm.xlu0 %1435, %v226
        %v1437 = vpop.permute.xlu0 %1436
        %1438 = vset.pattern.permute.xlu0 7
        %1439 = vperm.xlu0 %1438, %v227
        %v1440 = vpop.permute.xlu0 %1439
        %1441 = vset.pattern.permute.xlu0 7
        %1442 = vperm.xlu0 %1441, %v228
        %v1443 = vpop.permute.xlu0 %1442
        %1444 = vset.pattern.permute.xlu0 7
        %1445 = vperm.xlu0 %1444, %v229
        %v1446 = vpop.permute.xlu0 %1445
        %1447 = vset.pattern.permute.xlu0 7
        %1448 = vperm.xlu0 %1447, %v230
        %v1449 = vpop.permute.xlu0 %1448
        %1450 = vset.pattern.permute.xlu0 7
        %1451 = vperm.xlu0 %1450, %v231
        %v1452 = vpop.permute.xlu0 %1451
        %vm1453 = vcmp.eq.s32.totalorder %v233, %v1407
        %vm1454 = vcmp.eq.s32.totalorder %v234, %v1407
        %vm1455 = vcmp.eq.s32.totalorder %v235, %v1407
        %vm1456 = vcmp.eq.s32.totalorder %v236, %v1407
        %vm1457 = vcmp.eq.s32.totalorder %v233, %v1410
        %vm1458 = vcmp.eq.s32.totalorder %v234, %v1410
        %vm1459 = vcmp.eq.s32.totalorder %v235, %v1410
        %vm1460 = vcmp.eq.s32.totalorder %v236, %v1410
        %vm1461 = vcmp.eq.s32.totalorder %v233, %v1413
        %vm1462 = vcmp.eq.s32.totalorder %v234, %v1413
        %vm1463 = vcmp.eq.s32.totalorder %v235, %v1413
        %vm1464 = vcmp.eq.s32.totalorder %v236, %v1413
        %vm1465 = vcmp.eq.s32.totalorder %v233, %v1416
        %vm1466 = vcmp.eq.s32.totalorder %v234, %v1416
        %vm1467 = vcmp.eq.s32.totalorder %v235, %v1416
        %vm1468 = vcmp.eq.s32.totalorder %v236, %v1416
        %vm1469 = vcmp.eq.s32.totalorder %v233, %v1419
        %vm1470 = vcmp.eq.s32.totalorder %v234, %v1419
        %vm1471 = vcmp.eq.s32.totalorder %v235, %v1419
        %vm1472 = vcmp.eq.s32.totalorder %v236, %v1419
        %vm1473 = vcmp.eq.s32.totalorder %v233, %v1422
        %vm1474 = vcmp.eq.s32.totalorder %v234, %v1422
        %vm1475 = vcmp.eq.s32.totalorder %v235, %v1422
        %vm1476 = vcmp.eq.s32.totalorder %v236, %v1422
        %vm1477 = vcmp.eq.s32.totalorder %v233, %v1425
        %vm1478 = vcmp.eq.s32.totalorder %v234, %v1425
        %vm1479 = vcmp.eq.s32.totalorder %v235, %v1425
        %vm1480 = vcmp.eq.s32.totalorder %v236, %v1425
        %vm1481 = vcmp.eq.s32.totalorder %v233, %v1428
        %vm1482 = vcmp.eq.s32.totalorder %v234, %v1428
        %vm1483 = vcmp.eq.s32.totalorder %v235, %v1428
        %vm1484 = vcmp.eq.s32.totalorder %v236, %v1428
        %vm1485 = vcmp.eq.s32.totalorder %v233, %v1431
        %vm1486 = vcmp.eq.s32.totalorder %v234, %v1431
        %vm1487 = vcmp.eq.s32.totalorder %v235, %v1431
        %vm1488 = vcmp.eq.s32.totalorder %v236, %v1431
        %vm1489 = vcmp.eq.s32.totalorder %v233, %v1434
        %vm1490 = vcmp.eq.s32.totalorder %v234, %v1434
        %vm1491 = vcmp.eq.s32.totalorder %v235, %v1434
        %vm1492 = vcmp.eq.s32.totalorder %v236, %v1434
        %vm1493 = vcmp.eq.s32.totalorder %v233, %v1437
        %vm1494 = vcmp.eq.s32.totalorder %v234, %v1437
        %vm1495 = vcmp.eq.s32.totalorder %v235, %v1437
        %vm1496 = vcmp.eq.s32.totalorder %v236, %v1437
        %vm1497 = vcmp.eq.s32.totalorder %v233, %v1440
        %vm1498 = vcmp.eq.s32.totalorder %v234, %v1440
        %vm1499 = vcmp.eq.s32.totalorder %v235, %v1440
        %vm1500 = vcmp.eq.s32.totalorder %v236, %v1440
        %vm1501 = vcmp.eq.s32.totalorder %v233, %v1443
        %vm1502 = vcmp.eq.s32.totalorder %v234, %v1443
        %vm1503 = vcmp.eq.s32.totalorder %v235, %v1443
        %vm1504 = vcmp.eq.s32.totalorder %v236, %v1443
        %vm1505 = vcmp.eq.s32.totalorder %v233, %v1446
        %vm1506 = vcmp.eq.s32.totalorder %v234, %v1446
        %vm1507 = vcmp.eq.s32.totalorder %v235, %v1446
        %vm1508 = vcmp.eq.s32.totalorder %v236, %v1446
        %vm1509 = vcmp.eq.s32.totalorder %v233, %v1449
        %vm1510 = vcmp.eq.s32.totalorder %v234, %v1449
        %vm1511 = vcmp.eq.s32.totalorder %v235, %v1449
        %vm1512 = vcmp.eq.s32.totalorder %v236, %v1449
        %vm1513 = vcmp.eq.s32.totalorder %v233, %v1452
        %vm1514 = vcmp.eq.s32.totalorder %v234, %v1452
        %vm1515 = vcmp.eq.s32.totalorder %v235, %v1452
        %vm1516 = vcmp.eq.s32.totalorder %v236, %v1452
        %vm1517 = vmor %vm1341, %vm1453
        %vm1518 = vmor %vm1342, %vm1454
        %vm1519 = vmor %vm1343, %vm1455
        %vm1520 = vmor %vm1344, %vm1456
        %vm1521 = vmor %vm1345, %vm1457
        %vm1522 = vmor %vm1346, %vm1458
        %vm1523 = vmor %vm1347, %vm1459
        %vm1524 = vmor %vm1348, %vm1460
        %vm1525 = vmor %vm1349, %vm1461
        %vm1526 = vmor %vm1350, %vm1462
        %vm1527 = vmor %vm1351, %vm1463
        %vm1528 = vmor %vm1352, %vm1464
        %vm1529 = vmor %vm1353, %vm1465
        %vm1530 = vmor %vm1354, %vm1466
        %vm1531 = vmor %vm1355, %vm1467
        %vm1532 = vmor %vm1356, %vm1468
        %vm1533 = vmor %vm1357, %vm1469
        %vm1534 = vmor %vm1358, %vm1470
        %vm1535 = vmor %vm1359, %vm1471
        %vm1536 = vmor %vm1360, %vm1472
        %vm1537 = vmor %vm1361, %vm1473
        %vm1538 = vmor %vm1362, %vm1474
        %vm1539 = vmor %vm1363, %vm1475
        %vm1540 = vmor %vm1364, %vm1476
        %vm1541 = vmor %vm1365, %vm1477
        %vm1542 = vmor %vm1366, %vm1478
        %vm1543 = vmor %vm1367, %vm1479
        %vm1544 = vmor %vm1368, %vm1480
        %vm1545 = vmor %vm1369, %vm1481
        %vm1546 = vmor %vm1370, %vm1482
        %vm1547 = vmor %vm1371, %vm1483
        %vm1548 = vmor %vm1372, %vm1484
        %vm1549 = vmor %vm1373, %vm1485
        %vm1550 = vmor %vm1374, %vm1486
        %vm1551 = vmor %vm1375, %vm1487
        %vm1552 = vmor %vm1376, %vm1488
        %vm1553 = vmor %vm1377, %vm1489
        %vm1554 = vmor %vm1378, %vm1490
        %vm1555 = vmor %vm1379, %vm1491
        %vm1556 = vmor %vm1380, %vm1492
        %vm1557 = vmor %vm1381, %vm1493
        %vm1558 = vmor %vm1382, %vm1494
        %vm1559 = vmor %vm1383, %vm1495
        %vm1560 = vmor %vm1384, %vm1496
        %vm1561 = vmor %vm1385, %vm1497
        %vm1562 = vmor %vm1386, %vm1498
        %vm1563 = vmor %vm1387, %vm1499
        %vm1564 = vmor %vm1388, %vm1500
        %vm1565 = vmor %vm1389, %vm1501
        %vm1566 = vmor %vm1390, %vm1502
        %vm1567 = vmor %vm1391, %vm1503
        %vm1568 = vmor %vm1392, %vm1504
        %vm1569 = vmor %vm1393, %vm1505
        %vm1570 = vmor %vm1394, %vm1506
        %vm1571 = vmor %vm1395, %vm1507
        %vm1572 = vmor %vm1396, %vm1508
        %vm1573 = vmor %vm1397, %vm1509
        %vm1574 = vmor %vm1398, %vm1510
        %vm1575 = vmor %vm1399, %vm1511
        %vm1576 = vmor %vm1400, %vm1512
        %vm1577 = vmor %vm1401, %vm1513
        %vm1578 = vmor %vm1402, %vm1514
        %vm1579 = vmor %vm1403, %vm1515
        %vm1580 = vmor %vm1404, %vm1516
        %v1581 = vsel %vm1517, 1, 0
        %v1582 = vsel %vm1518, 1, 0
        %v1583 = vsel %vm1519, 1, 0
        %v1584 = vsel %vm1520, 1, 0
        %v1585 = vsel %vm1521, 1, 0
        %v1586 = vsel %vm1522, 1, 0
        %v1587 = vsel %vm1523, 1, 0
        %v1588 = vsel %vm1524, 1, 0
        %v1589 = vsel %vm1525, 1, 0
        %v1590 = vsel %vm1526, 1, 0
        %v1591 = vsel %vm1527, 1, 0
        %v1592 = vsel %vm1528, 1, 0
        %v1593 = vsel %vm1529, 1, 0
        %v1594 = vsel %vm1530, 1, 0
        %v1595 = vsel %vm1531, 1, 0
        %v1596 = vsel %vm1532, 1, 0
        %v1597 = vsel %vm1533, 1, 0
        %v1598 = vsel %vm1534, 1, 0
        %v1599 = vsel %vm1535, 1, 0
        %v1600 = vsel %vm1536, 1, 0
        %v1601 = vsel %vm1537, 1, 0
        %v1602 = vsel %vm1538, 1, 0
        %v1603 = vsel %vm1539, 1, 0
        %v1604 = vsel %vm1540, 1, 0
        %v1605 = vsel %vm1541, 1, 0
        %v1606 = vsel %vm1542, 1, 0
        %v1607 = vsel %vm1543, 1, 0
        %v1608 = vsel %vm1544, 1, 0
        %v1609 = vsel %vm1545, 1, 0
        %v1610 = vsel %vm1546, 1, 0
        %v1611 = vsel %vm1547, 1, 0
        %v1612 = vsel %vm1548, 1, 0
        %v1613 = vsel %vm1549, 1, 0
        %v1614 = vsel %vm1550, 1, 0
        %v1615 = vsel %vm1551, 1, 0
        %v1616 = vsel %vm1552, 1, 0
        %v1617 = vsel %vm1553, 1, 0
        %v1618 = vsel %vm1554, 1, 0
        %v1619 = vsel %vm1555, 1, 0
        %v1620 = vsel %vm1556, 1, 0
        %v1621 = vsel %vm1557, 1, 0
        %v1622 = vsel %vm1558, 1, 0
        %v1623 = vsel %vm1559, 1, 0
        %v1624 = vsel %vm1560, 1, 0
        %v1625 = vsel %vm1561, 1, 0
        %v1626 = vsel %vm1562, 1, 0
        %v1627 = vsel %vm1563, 1, 0
        %v1628 = vsel %vm1564, 1, 0
        %v1629 = vsel %vm1565, 1, 0
        %v1630 = vsel %vm1566, 1, 0
        %v1631 = vsel %vm1567, 1, 0
        %v1632 = vsel %vm1568, 1, 0
        %v1633 = vsel %vm1569, 1, 0
        %v1634 = vsel %vm1570, 1, 0
        %v1635 = vsel %vm1571, 1, 0
        %v1636 = vsel %vm1572, 1, 0
        %v1637 = vsel %vm1573, 1, 0
        %v1638 = vsel %vm1574, 1, 0
        %v1639 = vsel %vm1575, 1, 0
        %v1640 = vsel %vm1576, 1, 0
        %v1641 = vsel %vm1577, 1, 0
        %v1642 = vsel %vm1578, 1, 0
        %v1643 = vsel %vm1579, 1, 0
        %v1644 = vsel %vm1580, 1, 0
        %v1645 = vcvt.s32.f32 %v1581
        %v1646 = vcvt.s32.f32 %v1582
        %v1647 = vcvt.s32.f32 %v1583
        %v1648 = vcvt.s32.f32 %v1584
        %v1649 = vcvt.s32.f32 %v1585
        %v1650 = vcvt.s32.f32 %v1586
        %v1651 = vcvt.s32.f32 %v1587
        %v1652 = vcvt.s32.f32 %v1588
        %v1653 = vcvt.s32.f32 %v1589
        %v1654 = vcvt.s32.f32 %v1590
        %v1655 = vcvt.s32.f32 %v1591
        %v1656 = vcvt.s32.f32 %v1592
        %v1657 = vcvt.s32.f32 %v1593
        %v1658 = vcvt.s32.f32 %v1594
        %v1659 = vcvt.s32.f32 %v1595
        %v1660 = vcvt.s32.f32 %v1596
        %v1661 = vcvt.s32.f32 %v1597
        %v1662 = vcvt.s32.f32 %v1598
        %v1663 = vcvt.s32.f32 %v1599
        %v1664 = vcvt.s32.f32 %v1600
        %v1665 = vcvt.s32.f32 %v1601
        %v1666 = vcvt.s32.f32 %v1602
        %v1667 = vcvt.s32.f32 %v1603
        %v1668 = vcvt.s32.f32 %v1604
        %v1669 = vcvt.s32.f32 %v1605
        %v1670 = vcvt.s32.f32 %v1606
        %v1671 = vcvt.s32.f32 %v1607
        %v1672 = vcvt.s32.f32 %v1608
        %v1673 = vcvt.s32.f32 %v1609
        %v1674 = vcvt.s32.f32 %v1610
        %v1675 = vcvt.s32.f32 %v1611
        %v1676 = vcvt.s32.f32 %v1612
        %v1677 = vcvt.s32.f32 %v1613
        %v1678 = vcvt.s32.f32 %v1614
        %v1679 = vcvt.s32.f32 %v1615
        %v1680 = vcvt.s32.f32 %v1616
        %v1681 = vcvt.s32.f32 %v1617
        %v1682 = vcvt.s32.f32 %v1618
        %v1683 = vcvt.s32.f32 %v1619
        %v1684 = vcvt.s32.f32 %v1620
        %v1685 = vcvt.s32.f32 %v1621
        %v1686 = vcvt.s32.f32 %v1622
        %v1687 = vcvt.s32.f32 %v1623
        %v1688 = vcvt.s32.f32 %v1624
        %v1689 = vcvt.s32.f32 %v1625
        %v1690 = vcvt.s32.f32 %v1626
        %v1691 = vcvt.s32.f32 %v1627
        %v1692 = vcvt.s32.f32 %v1628
        %v1693 = vcvt.s32.f32 %v1629
        %v1694 = vcvt.s32.f32 %v1630
        %v1695 = vcvt.s32.f32 %v1631
        %v1696 = vcvt.s32.f32 %v1632
        %v1697 = vcvt.s32.f32 %v1633
        %v1698 = vcvt.s32.f32 %v1634
        %v1699 = vcvt.s32.f32 %v1635
        %v1700 = vcvt.s32.f32 %v1636
        %v1701 = vcvt.s32.f32 %v1637
        %v1702 = vcvt.s32.f32 %v1638
        %v1703 = vcvt.s32.f32 %v1639
        %v1704 = vcvt.s32.f32 %v1640
        %v1705 = vcvt.s32.f32 %v1641
        %v1706 = vcvt.s32.f32 %v1642
        %v1707 = vcvt.s32.f32 %v1643
        %v1708 = vcvt.s32.f32 %v1644
        %v1709 = vld [vmem:[#allocation2] sm:$0xff]
        %v1710 = vld [vmem:[#allocation2 + $0x8] sm:$0xff]
        %v1711 = vld [vmem:[#allocation2 + $0x10] sm:$0xff]
        %v1712 = vld [vmem:[#allocation2 + $0x18] sm:$0xff]
        %v1713 = vld [vmem:[#allocation2 + $0x20] sm:$0xff]
        %v1714 = vld [vmem:[#allocation2 + $0x28] sm:$0xff]
        %v1715 = vld [vmem:[#allocation2 + $0x30] sm:$0xff]
        %v1716 = vld [vmem:[#allocation2 + $0x38] sm:$0xff]
        %v1717 = vld [vmem:[#allocation2 + $0x40] sm:$0xff]
        %v1718 = vld [vmem:[#allocation2 + $0x48] sm:$0xff]
        %v1719 = vld [vmem:[#allocation2 + $0x50] sm:$0xff]
        %v1720 = vld [vmem:[#allocation2 + $0x58] sm:$0xff]
        %v1721 = vld [vmem:[#allocation2 + $0x60] sm:$0xff]
        %v1722 = vld [vmem:[#allocation2 + $0x68] sm:$0xff]
        %v1723 = vld [vmem:[#allocation2 + $0x70] sm:$0xff]
        %v1724 = vld [vmem:[#allocation2 + $0x78] sm:$0xff]
        %v1725 = vld [vmem:[#allocation2 + $0x80] sm:$0xff]
        %v1726 = vld [vmem:[#allocation2 + $0x88] sm:$0xff]
        %v1727 = vld [vmem:[#allocation2 + $0x90] sm:$0xff]
        %v1728 = vld [vmem:[#allocation2 + $0x98] sm:$0xff]
        %v1729 = vld [vmem:[#allocation2 + $0xa0] sm:$0xff]
        %v1730 = vld [vmem:[#allocation2 + $0xa8] sm:$0xff]
        %v1731 = vld [vmem:[#allocation2 + $0xb0] sm:$0xff]
        %v1732 = vld [vmem:[#allocation2 + $0xb8] sm:$0xff]
        %v1733 = vld [vmem:[#allocation2 + $0xc0] sm:$0xff]
        %v1734 = vld [vmem:[#allocation2 + $0xc8] sm:$0xff]
        %v1735 = vld [vmem:[#allocation2 + $0xd0] sm:$0xff]
        %v1736 = vld [vmem:[#allocation2 + $0xd8] sm:$0xff]
        %v1737 = vld [vmem:[#allocation2 + $0xe0] sm:$0xff]
        %v1738 = vld [vmem:[#allocation2 + $0xe8] sm:$0xff]
        %v1739 = vld [vmem:[#allocation2 + $0xf0] sm:$0xff]
        %v1740 = vld [vmem:[#allocation2 + $0xf8] sm:$0xff]
        %v1741 = vld [vmem:[#allocation2 + $0x100] sm:$0xff]
        %v1742 = vld [vmem:[#allocation2 + $0x108] sm:$0xff]
        %v1743 = vld [vmem:[#allocation2 + $0x110] sm:$0xff]
        %v1744 = vld [vmem:[#allocation2 + $0x118] sm:$0xff]
        %v1745 = vld [vmem:[#allocation2 + $0x120] sm:$0xff]
        %v1746 = vld [vmem:[#allocation2 + $0x128] sm:$0xff]
        %v1747 = vld [vmem:[#allocation2 + $0x130] sm:$0xff]
        %v1748 = vld [vmem:[#allocation2 + $0x138] sm:$0xff]
        %v1749 = vld [vmem:[#allocation2 + $0x140] sm:$0xff]
        %v1750 = vld [vmem:[#allocation2 + $0x148] sm:$0xff]
        %v1751 = vld [vmem:[#allocation2 + $0x150] sm:$0xff]
        %v1752 = vld [vmem:[#allocation2 + $0x158] sm:$0xff]
        %v1753 = vld [vmem:[#allocation2 + $0x160] sm:$0xff]
        %v1754 = vld [vmem:[#allocation2 + $0x168] sm:$0xff]
        %v1755 = vld [vmem:[#allocation2 + $0x170] sm:$0xff]
        %v1756 = vld [vmem:[#allocation2 + $0x178] sm:$0xff]
        %v1757 = vld [vmem:[#allocation2 + $0x180] sm:$0xff]
        %v1758 = vld [vmem:[#allocation2 + $0x188] sm:$0xff]
        %v1759 = vld [vmem:[#allocation2 + $0x190] sm:$0xff]
        %v1760 = vld [vmem:[#allocation2 + $0x198] sm:$0xff]
        %v1761 = vld [vmem:[#allocation2 + $0x1a0] sm:$0xff]
        %v1762 = vld [vmem:[#allocation2 + $0x1a8] sm:$0xff]
        %v1763 = vld [vmem:[#allocation2 + $0x1b0] sm:$0xff]
        %v1764 = vld [vmem:[#allocation2 + $0x1b8] sm:$0xff]
        %v1765 = vld [vmem:[#allocation2 + $0x1c0] sm:$0xff]
        %v1766 = vld [vmem:[#allocation2 + $0x1c8] sm:$0xff]
        %v1767 = vld [vmem:[#allocation2 + $0x1d0] sm:$0xff]
        %v1768 = vld [vmem:[#allocation2 + $0x1d8] sm:$0xff]
        %v1769 = vld [vmem:[#allocation2 + $0x1e0] sm:$0xff]
        %v1770 = vld [vmem:[#allocation2 + $0x1e8] sm:$0xff]
        %v1771 = vld [vmem:[#allocation2 + $0x1f0] sm:$0xff]
        %v1772 = vld [vmem:[#allocation2 + $0x1f8] sm:$0xff]
        %1773 = vmatprep.subr.mxu0 0.0
        %1774 = vmatpush1.msra.mxu0 %v1709
        %1775 = vmatprep.subr.mxu0 0.0
        %1776 = vmatpush1.msra.mxu0 %v1710
        %1777 = vmatprep.subr.mxu0 0.0
        %1778 = vmatpush1.msra.mxu0 %v1711
        %1779 = vmatprep.subr.mxu0 0.0
        %1780 = vmatpush1.msra.mxu0 %v1712
        %1781 = vmatprep.subr.mxu0 0.0
        %1782 = vmatpush1.msra.mxu0 %v1713
        %1783 = vmatprep.subr.mxu0 0.0
        %1784 = vmatpush1.msra.mxu0 %v1714
        %1785 = vmatprep.subr.mxu0 0.0
        %1786 = vmatpush1.msra.mxu0 %v1715
        %1787 = vmatprep.subr.mxu0 0.0
        %1788 = vmatpush1.msra.mxu0 %v1716
        %1789 = vmatprep.subr.mxu0 0.0
        %1790 = vmatpush1.msra.mxu0 %v1717
        %1791 = vmatprep.subr.mxu0 0.0
        %1792 = vmatpush1.msra.mxu0 %v1718
        %1793 = vmatprep.subr.mxu0 0.0
        %1794 = vmatpush1.msra.mxu0 %v1719
        %1795 = vmatprep.subr.mxu0 0.0
        %1796 = vmatpush1.msra.mxu0 %v1720
        %1797 = vmatprep.subr.mxu0 0.0
        %1798 = vmatpush1.msra.mxu0 %v1721
        %1799 = vmatprep.subr.mxu0 0.0
        %1800 = vmatpush1.msra.mxu0 %v1722
        %1801 = vmatprep.subr.mxu0 0.0
        %1802 = vmatpush1.msra.mxu0 %v1723
        %1803 = vmatprep.subr.mxu0 0.0
        %1804 = vmatpush1.msra.mxu0 %v1724
        %1805 = vmatprep.subr.mxu0 0.0
        %1806 = vmatpush1.msra.mxu0 %v1725
        %1807 = vmatprep.subr.mxu0 0.0
        %1808 = vmatpush1.msra.mxu0 %v1726
        %1809 = vmatprep.subr.mxu0 0.0
        %1810 = vmatpush1.msra.mxu0 %v1727
        %1811 = vmatprep.subr.mxu0 0.0
        %1812 = vmatpush1.msra.mxu0 %v1728
        %1813 = vmatprep.subr.mxu0 0.0
        %1814 = vmatpush1.msra.mxu0 %v1729
        %1815 = vmatprep.subr.mxu0 0.0
        %1816 = vmatpush1.msra.mxu0 %v1730
        %1817 = vmatprep.subr.mxu0 0.0
        %1818 = vmatpush1.msra.mxu0 %v1731
        %1819 = vmatprep.subr.mxu0 0.0
        %1820 = vmatpush1.msra.mxu0 %v1732
        %1821 = vmatprep.subr.mxu0 0.0
        %1822 = vmatpush1.msra.mxu0 %v1733
        %1823 = vmatprep.subr.mxu0 0.0
        %1824 = vmatpush1.msra.mxu0 %v1734
        %1825 = vmatprep.subr.mxu0 0.0
        %1826 = vmatpush1.msra.mxu0 %v1735
        %1827 = vmatprep.subr.mxu0 0.0
        %1828 = vmatpush1.msra.mxu0 %v1736
        %1829 = vmatprep.subr.mxu0 0.0
        %1830 = vmatpush1.msra.mxu0 %v1737
        %1831 = vmatprep.subr.mxu0 0.0
        %1832 = vmatpush1.msra.mxu0 %v1738
        %1833 = vmatprep.subr.mxu0 0.0
        %1834 = vmatpush1.msra.mxu0 %v1739
        %1835 = vmatprep.subr.mxu0 0.0
        %1836 = vmatpush1.msra.mxu0 %v1740
        %1837 = vmatprep.mubr.f32.mxu0 %v1646
        %1838 = vmatmul.mubr.f32.gmra.mrb[0].mxu0 %v1645
        %v1839 = vpop.f32.mrb[0].mxu0
        %v1840 = vadd.f32 0.0, %v1839
        %v1841 = vpop.f32.mrb[0].mxu0
        %1842 = vmatprep.mubr.f32.mxu0 %v1650
        %1843 = vmatmul.mubr.f32.gmra.mrb[0].mxu0 %v1649
        %v1844 = vpop.f32.mrb[0].mxu0
        %v1845 = vadd.f32 0.0, %v1844
        %v1846 = vpop.f32.mrb[0].mxu0
        %1847 = vmatprep.mubr.f32.mxu0 %v1654
        %1848 = vmatmul.mubr.f32.gmra.mrb[0].mxu0 %v1653
        %v1849 = vpop.f32.mrb[0].mxu0
        %v1850 = vadd.f32 0.0, %v1849
        %v1851 = vpop.f32.mrb[0].mxu0
        %1852 = vmatprep.mubr.f32.mxu0 %v1658
        %1853 = vmatmul.mubr.f32.gmra.mrb[0].mxu0 %v1657
        %v1854 = vpop.f32.mrb[0].mxu0
        %v1855 = vadd.f32 0.0, %v1854
        %v1856 = vpop.f32.mrb[0].mxu0
        %1857 = vmatprep.mubr.f32.mxu0 %v1662
        %1858 = vmatmul.mubr.f32.gmra.mrb[0].mxu0 %v1661
        %v1859 = vpop.f32.mrb[0].mxu0
        %v1860 = vadd.f32 0.0, %v1859
        %v1861 = vpop.f32.mrb[0].mxu0
        %1862 = vmatprep.mubr.f32.mxu0 %v1666
        %1863 = vmatmul.mubr.f32.gmra.mrb[0].mxu0 %v1665
        %v1864 = vpop.f32.mrb[0].mxu0
        %v1865 = vadd.f32 0.0, %v1864
        %v1866 = vpop.f32.mrb[0].mxu0
        %1867 = vmatprep.mubr.f32.mxu0 %v1670
        %1868 = vmatmul.mubr.f32.gmra.mrb[0].mxu0 %v1669
        %v1869 = vpop.f32.mrb[0].mxu0
        %v1870 = vadd.f32 0.0, %v1869
        %v1871 = vpop.f32.mrb[0].mxu0
        %1872 = vmatprep.mubr.f32.mxu0 %v1674
        %1873 = vmatmul.mubr.f32.gmra.mrb[0].mxu0 %v1673
        %v1874 = vpop.f32.mrb[0].mxu0
        %v1875 = vadd.f32 0.0, %v1874
        %v1876 = vpop.f32.mrb[0].mxu0
        %1877 = vmatprep.mubr.f32.mxu0 %v1678
        %1878 = vmatmul.mubr.f32.gmra.mrb[0].mxu0 %v1677
        %v1879 = vpop.f32.mrb[0].mxu0
        %v1880 = vadd.f32 0.0, %v1879
        %v1881 = vpop.f32.mrb[0].mxu0
        %1882 = vmatprep.mubr.f32.mxu0 %v1682
        %1883 = vmatmul.mubr.f32.gmra.mrb[0].mxu0 %v1681
        %v1884 = vpop.f32.mrb[0].mxu0
        %v1885 = vadd.f32 0.0, %v1884
        %v1886 = vpop.f32.mrb[0].mxu0
        %1887 = vmatprep.mubr.f32.mxu0 %v1686
        %1888 = vmatmul.mubr.f32.gmra.mrb[0].mxu0 %v1685
        %v1889 = vpop.f32.mrb[0].mxu0
        %v1890 = vadd.f32 0.0, %v1889
        %v1891 = vpop.f32.mrb[0].mxu0
        %1892 = vmatprep.mubr.f32.mxu0 %v1690
        %1893 = vmatmul.mubr.f32.gmra.mrb[0].mxu0 %v1689
        %v1894 = vpop.f32.mrb[0].mxu0
        %v1895 = vadd.f32 0.0, %v1894
        %v1896 = vpop.f32.mrb[0].mxu0
        %1897 = vmatprep.mubr.f32.mxu0 %v1694
        %1898 = vmatmul.mubr.f32.gmra.mrb[0].mxu0 %v1693
        %v1899 = vpop.f32.mrb[0].mxu0
        %v1900 = vadd.f32 0.0, %v1899
        %v1901 = vpop.f32.mrb[0].mxu0
        %1902 = vmatprep.mubr.f32.mxu0 %v1698
        %1903 = vmatmul.mubr.f32.gmra.mrb[0].mxu0 %v1697
        %v1904 = vpop.f32.mrb[0].mxu0
        %v1905 = vadd.f32 0.0, %v1904
        %v1906 = vpop.f32.mrb[0].mxu0
        %1907 = vmatprep.mubr.f32.mxu0 %v1702
        %1908 = vmatmul.mubr.f32.gmra.mrb[0].mxu0 %v1701
        %v1909 = vpop.f32.mrb[0].mxu0
        %v1910 = vadd.f32 0.0, %v1909
        %v1911 = vpop.f32.mrb[0].mxu0
        %1912 = vmatprep.mubr.f32.mxu0 %v1706
        %1913 = vmatmul.mubr.f32.gmra.mrb[0].mxu0 %v1705
        %v1914 = vpop.f32.mrb[0].mxu0
        %v1915 = vadd.f32 0.0, %v1914
        %v1916 = vpop.f32.mrb[0].mxu0
        %1917 = vdwg.mxu0
        %1918 = vmatprep.subr.mxu0 0.0
        %1919 = vmatpush1.msra.mxu0 %v1741
        %1920 = vmatprep.subr.mxu0 0.0
        %1921 = vmatpush1.msra.mxu0 %v1742
        %1922 = vmatprep.subr.mxu0 0.0
        %1923 = vmatpush1.msra.mxu0 %v1743
        %1924 = vmatprep.subr.mxu0 0.0
        %1925 = vmatpush1.msra.mxu0 %v1744
        %1926 = vmatprep.subr.mxu0 0.0
        %1927 = vmatpush1.msra.mxu0 %v1745
        %1928 = vmatprep.subr.mxu0 0.0
        %1929 = vmatpush1.msra.mxu0 %v1746
        %1930 = vmatprep.subr.mxu0 0.0
        %1931 = vmatpush1.msra.mxu0 %v1747
        %1932 = vmatprep.subr.mxu0 0.0
        %1933 = vmatpush1.msra.mxu0 %v1748
        %1934 = vmatprep.subr.mxu0 0.0
        %1935 = vmatpush1.msra.mxu0 %v1749
        %1936 = vmatprep.subr.mxu0 0.0
        %1937 = vmatpush1.msra.mxu0 %v1750
        %1938 = vmatprep.subr.mxu0 0.0
        %1939 = vmatpush1.msra.mxu0 %v1751
        %1940 = vmatprep.subr.mxu0 0.0
        %1941 = vmatpush1.msra.mxu0 %v1752
        %1942 = vmatprep.subr.mxu0 0.0
        %1943 = vmatpush1.msra.mxu0 %v1753
        %1944 = vmatprep.subr.mxu0 0.0
        %1945 = vmatpush1.msra.mxu0 %v1754
        %1946 = vmatprep.subr.mxu0 0.0
        %1947 = vmatpush1.msra.mxu0 %v1755
        %1948 = vmatprep.subr.mxu0 0.0
        %1949 = vmatpush1.msra.mxu0 %v1756
        %1950 = vmatprep.subr.mxu0 0.0
        %1951 = vmatpush1.msra.mxu0 %v1757
        %1952 = vmatprep.subr.mxu0 0.0
        %1953 = vmatpush1.msra.mxu0 %v1758
        %1954 = vmatprep.subr.mxu0 0.0
        %1955 = vmatpush1.msra.mxu0 %v1759
        %1956 = vmatprep.subr.mxu0 0.0
        %1957 = vmatpush1.msra.mxu0 %v1760
        %1958 = vmatprep.subr.mxu0 0.0
        %1959 = vmatpush1.msra.mxu0 %v1761
        %1960 = vmatprep.subr.mxu0 0.0
        %1961 = vmatpush1.msra.mxu0 %v1762
        %1962 = vmatprep.subr.mxu0 0.0
        %1963 = vmatpush1.msra.mxu0 %v1763
        %1964 = vmatprep.subr.mxu0 0.0
        %1965 = vmatpush1.msra.mxu0 %v1764
        %1966 = vmatprep.subr.mxu0 0.0
        %1967 = vmatpush1.msra.mxu0 %v1765
        %1968 = vmatprep.subr.mxu0 0.0
        %1969 = vmatpush1.msra.mxu0 %v1766
        %1970 = vmatprep.subr.mxu0 0.0
        %1971 = vmatpush1.msra.mxu0 %v1767
        %1972 = vmatprep.subr.mxu0 0.0
        %1973 = vmatpush1.msra.mxu0 %v1768
        %1974 = vmatprep.subr.mxu0 0.0
        %1975 = vmatpush1.msra.mxu0 %v1769
        %1976 = vmatprep.subr.mxu0 0.0
        %1977 = vmatpush1.msra.mxu0 %v1770
        %1978 = vmatprep.subr.mxu0 0.0
        %1979 = vmatpush1.msra.mxu0 %v1771
        %1980 = vmatprep.subr.mxu0 0.0
        %1981 = vmatpush1.msra.mxu0 %v1772
        %1982 = vmatprep.mubr.f32.mxu0 %v1648
        %1983 = vmatmul.mubr.f32.gmra.mrb[0].mxu0 %v1647
        %v1984 = vpop.f32.mrb[0].mxu0
        %v1985 = vadd.f32 %v1840, %v1984
        %v1986 = vpop.f32.mrb[0].mxu0
        %1987 = vmatprep.mubr.f32.mxu0 %v1652
        %1988 = vmatmul.mubr.f32.gmra.mrb[0].mxu0 %v1651
        %v1989 = vpop.f32.mrb[0].mxu0
        %v1990 = vadd.f32 %v1845, %v1989
        %v1991 = vpop.f32.mrb[0].mxu0
        %1992 = vmatprep.mubr.f32.mxu0 %v1656
        %1993 = vmatmul.mubr.f32.gmra.mrb[0].mxu0 %v1655
        %v1994 = vpop.f32.mrb[0].mxu0
        %v1995 = vadd.f32 %v1850, %v1994
        %v1996 = vpop.f32.mrb[0].mxu0
        %1997 = vmatprep.mubr.f32.mxu0 %v1660
        %1998 = vmatmul.mubr.f32.gmra.mrb[0].mxu0 %v1659
        %v1999 = vpop.f32.mrb[0].mxu0
        %v2000 = vadd.f32 %v1855, %v1999
        %v2001 = vpop.f32.mrb[0].mxu0
        %2002 = vmatprep.mubr.f32.mxu0 %v1664
        %2003 = vmatmul.mubr.f32.gmra.mrb[0].mxu0 %v1663
        %v2004 = vpop.f32.mrb[0].mxu0
        %v2005 = vadd.f32 %v1860, %v2004
        %v2006 = vpop.f32.mrb[0].mxu0
        %2007 = vmatprep.mubr.f32.mxu0 %v1668
        %2008 = vmatmul.mubr.f32.gmra.mrb[0].mxu0 %v1667
        %v2009 = vpop.f32.mrb[0].mxu0
        %v2010 = vadd.f32 %v1865, %v2009
        %v2011 = vpop.f32.mrb[0].mxu0
        %2012 = vmatprep.mubr.f32.mxu0 %v1672
        %2013 = vmatmul.mubr.f32.gmra.mrb[0].mxu0 %v1671
        %v2014 = vpop.f32.mrb[0].mxu0
        %v2015 = vadd.f32 %v1870, %v2014
        %v2016 = vpop.f32.mrb[0].mxu0
        %2017 = vmatprep.mubr.f32.mxu0 %v1676
        %2018 = vmatmul.mubr.f32.gmra.mrb[0].mxu0 %v1675
        %v2019 = vpop.f32.mrb[0].mxu0
        %v2020 = vadd.f32 %v1875, %v2019
        %v2021 = vpop.f32.mrb[0].mxu0
        %2022 = vmatprep.mubr.f32.mxu0 %v1680
        %2023 = vmatmul.mubr.f32.gmra.mrb[0].mxu0 %v1679
        %v2024 = vpop.f32.mrb[0].mxu0
        %v2025 = vadd.f32 %v1880, %v2024
        %v2026 = vpop.f32.mrb[0].mxu0
        %2027 = vmatprep.mubr.f32.mxu0 %v1684
        %2028 = vmatmul.mubr.f32.gmra.mrb[0].mxu0 %v1683
        %v2029 = vpop.f32.mrb[0].mxu0
        %v2030 = vadd.f32 %v1885, %v2029
        %v2031 = vpop.f32.mrb[0].mxu0
        %2032 = vmatprep.mubr.f32.mxu0 %v1688
        %2033 = vmatmul.mubr.f32.gmra.mrb[0].mxu0 %v1687
        %v2034 = vpop.f32.mrb[0].mxu0
        %v2035 = vadd.f32 %v1890, %v2034
        %v2036 = vpop.f32.mrb[0].mxu0
        %2037 = vmatprep.mubr.f32.mxu0 %v1692
        %2038 = vmatmul.mubr.f32.gmra.mrb[0].mxu0 %v1691
        %v2039 = vpop.f32.mrb[0].mxu0
        %v2040 = vadd.f32 %v1895, %v2039
        %v2041 = vpop.f32.mrb[0].mxu0
        %2042 = vmatprep.mubr.f32.mxu0 %v1696
        %2043 = vmatmul.mubr.f32.gmra.mrb[0].mxu0 %v1695
        %v2044 = vpop.f32.mrb[0].mxu0
        %v2045 = vadd.f32 %v1900, %v2044
        %v2046 = vpop.f32.mrb[0].mxu0
        %2047 = vmatprep.mubr.f32.mxu0 %v1700
        %2048 = vmatmul.mubr.f32.gmra.mrb[0].mxu0 %v1699
        %v2049 = vpop.f32.mrb[0].mxu0
        %v2050 = vadd.f32 %v1905, %v2049
        %v2051 = vpop.f32.mrb[0].mxu0
        %2052 = vmatprep.mubr.f32.mxu0 %v1704
        %2053 = vmatmul.mubr.f32.gmra.mrb[0].mxu0 %v1703
        %v2054 = vpop.f32.mrb[0].mxu0
        %v2055 = vadd.f32 %v1910, %v2054
        %v2056 = vpop.f32.mrb[0].mxu0
        %2057 = vmatprep.mubr.f32.mxu0 %v1708
        %2058 = vmatmul.mubr.f32.gmra.mrb[0].mxu0 %v1707
        %v2059 = vpop.f32.mrb[0].mxu0
        %v2060 = vadd.f32 %v1915, %v2059
        %v2061 = vpop.f32.mrb[0].mxu0
        %2062 = vdwg.mxu0
        %v2063 = vld [vmem:[%s3] sm:$0x7]
        %vm2064 = vcmp.lt.s32.totalorder %v233, 32
        %vm2065 = vcmp.ge.s32.totalorder %v233, 32
        %vm2066 = vcmp.lt.s32.totalorder %v233, 48
        %vm2067 = vmand %vm2065, %vm2066
        %v2068 = vlaneseq
        %v2069 = vshrl.u32 %v2068, 7
        %v2070 = vsub.s32 0, %v2069
        %v2071 = vrot.slane %v2063, %v2070
        %v2072 = vadd.f32 %v1985, %v2071
        %v2073 = vadd.f32 %v1990, %v2071
        %v2074 = vadd.f32 %v1995, %v2071
        %v2075 = vadd.f32 %v2000, %v2071
        %v2076 = vadd.f32 %v2005, %v2071
        %v2077 = vadd.f32 %v2010, %v2071
        %v2078 = vadd.f32 %v2015, %v2071
        %v2079 = vadd.f32 %v2020, %v2071
        %v2080 = vadd.f32 %v2025, %v2071
        %v2081 = vadd.f32 %v2030, %v2071
        %v2082 = vadd.f32 %v2035, %v2071
        %v2083 = vadd.f32 %v2040, %v2071
        %v2084 = vadd.f32 %v2045, %v2071
        %v2085 = vadd.f32 %v2050, %v2071
        %v2086 = vadd.f32 %v2055, %v2071
        %v2087 = vadd.f32 %v2060, %v2071
        %v2088 = vmax.f32 %v2072, 0.0
        %v2089 = vmax.f32 %v2073, 0.0
        %v2090 = vmax.f32 %v2074, 0.0
        %v2091 = vmax.f32 %v2075, 0.0
        %v2092 = vmax.f32 %v2076, 0.0
        %v2093 = vmax.f32 %v2077, 0.0
        %v2094 = vmax.f32 %v2078, 0.0
        %v2095 = vmax.f32 %v2079, 0.0
        %v2096 = vmax.f32 %v2080, 0.0
        %v2097 = vmax.f32 %v2081, 0.0
        %v2098 = vmax.f32 %v2082, 0.0
        %v2099 = vmax.f32 %v2083, 0.0
        %v2100 = vmax.f32 %v2084, 0.0
        %v2101 = vmax.f32 %v2085, 0.0
        %v2102 = vmax.f32 %v2086, 0.0
        %v2103 = vmax.f32 %v2087, 0.0
        %v2104 = vmul.f32 %v1985, %v1985
        %v2105 = vmul.f32 %v1990, %v1990
        %v2106 = vmul.f32 %v1995, %v1995
        %v2107 = vmul.f32 %v2000, %v2000
        %v2108 = vmul.f32 %v2005, %v2005
        %v2109 = vmul.f32 %v2010, %v2010
        %v2110 = vmul.f32 %v2015, %v2015
        %v2111 = vmul.f32 %v2020, %v2020
        %v2112 = vmul.f32 %v2025, %v2025
        %v2113 = vmul.f32 %v2030, %v2030
        %v2114 = vmul.f32 %v2035, %v2035
        %v2115 = vmul.f32 %v2040, %v2040
        %v2116 = vmul.f32 %v2045, %v2045
        %v2117 = vmul.f32 %v2050, %v2050
        %v2118 = vmul.f32 %v2055, %v2055
        %v2119 = vmul.f32 %v2060, %v2060
        %v2120 = vsel %vm2067, 1, 0
        %vm2121 = vcmp.eq.s32.totalorder %v2120, 1
        %v2122 = vsel %vm2121, %v2104, %v1985
        %v2123 = vsel %vm2121, %v2105, %v1990
        %v2124 = vsel %vm2121, %v2106, %v1995
        %v2125 = vsel %vm2121, %v2107, %v2000
        %v2126 = vsel %vm2121, %v2108, %v2005
        %v2127 = vsel %vm2121, %v2109, %v2010
        %v2128 = vsel %vm2121, %v2110, %v2015
        %v2129 = vsel %vm2121, %v2111, %v2020
        %v2130 = vsel %vm2121, %v2112, %v2025
        %v2131 = vsel %vm2121, %v2113, %v2030
        %v2132 = vsel %vm2121, %v2114, %v2035
        %v2133 = vsel %vm2121, %v2115, %v2040
        %v2134 = vsel %vm2121, %v2116, %v2045
        %v2135 = vsel %vm2121, %v2117, %v2050
        %v2136 = vsel %vm2121, %v2118, %v2055
        %v2137 = vsel %vm2121, %v2119, %v2060
        %v2138 = vsel %vm2064, 1, 0
        %vm2139 = vcmp.eq.s32.totalorder %v2138, 1
        %v2140 = vsel %vm2139, %v2088, %v2122
        %v2141 = vsel %vm2139, %v2089, %v2123
        %v2142 = vsel %vm2139, %v2090, %v2124
        %v2143 = vsel %vm2139, %v2091, %v2125
        %v2144 = vsel %vm2139, %v2092, %v2126
        %v2145 = vsel %vm2139, %v2093, %v2127
        %v2146 = vsel %vm2139, %v2094, %v2128
        %v2147 = vsel %vm2139, %v2095, %v2129
        %v2148 = vsel %vm2139, %v2096, %v2130
        %v2149 = vsel %vm2139, %v2097, %v2131
        %v2150 = vsel %vm2139, %v2098, %v2132
        %v2151 = vsel %vm2139, %v2099, %v2133
        %v2152 = vsel %vm2139, %v2100, %v2134
        %v2153 = vsel %vm2139, %v2101, %v2135
        %v2154 = vsel %vm2139, %v2102, %v2136
        %v2155 = vsel %vm2139, %v2103, %v2137
        %v2156 = vld [vmem:[%s2] sm:$0xff]
        %v2157 = vld [vmem:[%s2 + $0x8] sm:$0xff]
        %v2158 = vld [vmem:[%s2 + $0x10] sm:$0xff]
        %v2159 = vld [vmem:[%s2 + $0x18] sm:$0xff]
        %v2160 = vld [vmem:[%s2 + $0x20] sm:$0xff]
        %v2161 = vld [vmem:[%s2 + $0x28] sm:$0xff]
        %v2162 = vld [vmem:[%s2 + $0x30] sm:$0xff]
        %v2163 = vld [vmem:[%s2 + $0x38] sm:$0xff]
        %v2164 = vld [vmem:[%s2 + $0x40] sm:$0xff]
        %v2165 = vld [vmem:[%s2 + $0x48] sm:$0xff]
        %v2166 = vld [vmem:[%s2 + $0x50] sm:$0xff]
        %v2167 = vld [vmem:[%s2 + $0x58] sm:$0xff]
        %v2168 = vld [vmem:[%s2 + $0x60] sm:$0xff]
        %v2169 = vld [vmem:[%s2 + $0x68] sm:$0xff]
        %v2170 = vld [vmem:[%s2 + $0x70] sm:$0xff]
        %v2171 = vld [vmem:[%s2 + $0x78] sm:$0xff]
        %v2172 = vlaneseq
        %v2173 = vshrl.u32 %v2172, 7
        %v2174 = vsub.s32 1, %v2173
        %v2175 = vrot.slane %v2063, %v2174
        %2176 = vmatprep.subr.mxu0 0.0
        %2177 = vmatpush1.msra.mxu0 %v2156
        %2178 = vmatprep.subr.mxu0 0.0
        %2179 = vmatpush1.msra.mxu0 %v2157
        %2180 = vmatprep.subr.mxu0 0.0
        %2181 = vmatpush1.msra.mxu0 %v2158
        %2182 = vmatprep.subr.mxu0 0.0
        %2183 = vmatpush1.msra.mxu0 %v2159
        %2184 = vmatprep.subr.mxu0 0.0
        %2185 = vmatpush1.msra.mxu0 %v2160
        %2186 = vmatprep.subr.mxu0 0.0
        %2187 = vmatpush1.msra.mxu0 %v2161
        %2188 = vmatprep.subr.mxu0 0.0
        %2189 = vmatpush1.msra.mxu0 %v2162
        %2190 = vmatprep.subr.mxu0 0.0
        %2191 = vmatpush1.msra.mxu0 %v2163
        %2192 = vmatprep.subr.mxu0 0.0
        %2193 = vmatpush1.msra.mxu0 %v2164
        %2194 = vmatprep.subr.mxu0 0.0
        %2195 = vmatpush1.msra.mxu0 %v2165
        %2196 = vmatprep.subr.mxu0 0.0
        %2197 = vmatpush1.msra.mxu0 %v2166
        %2198 = vmatprep.subr.mxu0 0.0
        %2199 = vmatpush1.msra.mxu0 %v2167
        %2200 = vmatprep.subr.mxu0 0.0
        %2201 = vmatpush1.msra.mxu0 %v2168
        %2202 = vmatprep.subr.mxu0 0.0
        %2203 = vmatpush1.msra.mxu0 %v2169
        %2204 = vmatprep.subr.mxu0 0.0
        %2205 = vmatpush1.msra.mxu0 %v2170
        %2206 = vmatprep.subr.mxu0 0.0
        %2207 = vmatpush1.msra.mxu0 %v2171
        %2208 = vmatprep.subr.mxu0 0.0
        %2209 = vmatpush1.msra.mxu0 0.0
        %2210 = vmatprep.subr.mxu0 0.0
        %2211 = vmatpush1.msra.mxu0 0.0
        %2212 = vmatprep.subr.mxu0 0.0
        %2213 = vmatpush1.msra.mxu0 0.0
        %2214 = vmatprep.subr.mxu0 0.0
        %2215 = vmatpush1.msra.mxu0 0.0
        %2216 = vmatprep.subr.mxu0 0.0
        %2217 = vmatpush1.msra.mxu0 0.0
        %2218 = vmatprep.subr.mxu0 0.0
        %2219 = vmatpush1.msra.mxu0 0.0
        %2220 = vmatprep.subr.mxu0 0.0
        %2221 = vmatpush1.msra.mxu0 0.0
        %2222 = vmatprep.subr.mxu0 0.0
        %2223 = vmatpush1.msra.mxu0 0.0
        %2224 = vmatprep.subr.mxu0 0.0
        %2225 = vmatpush1.msra.mxu0 0.0
        %2226 = vmatprep.subr.mxu0 0.0
        %2227 = vmatpush1.msra.mxu0 0.0
        %2228 = vmatprep.subr.mxu0 0.0
        %2229 = vmatpush1.msra.mxu0 0.0
        %2230 = vmatprep.subr.mxu0 0.0
        %2231 = vmatpush1.msra.mxu0 0.0
        %2232 = vmatprep.subr.mxu0 0.0
        %2233 = vmatpush1.msra.mxu0 0.0
        %2234 = vmatprep.subr.mxu0 0.0
        %2235 = vmatpush1.msra.mxu0 0.0
        %2236 = vmatprep.subr.mxu0 0.0
        %2237 = vmatpush1.msra.mxu0 0.0
        %2238 = vmatprep.subr.mxu0 0.0
        %2239 = vmatpush1.msra.mxu0 0.0
        %2240 = vmatprep.mubr.f32.mxu0 0.0
        %2241 = vmatmul.mubr.f32.gmra.mrb[0].mxu0 %v2140
        %v2242 = vpop.f32.mrb[0].mxu0
        %v2243 = vadd.f32 %v2175, %v2242
        %v2244 = vpop.f32.mrb[0].mxu0
        %2245 = vmatprep.mubr.f32.mxu0 0.0
        %2246 = vmatmul.mubr.f32.gmra.mrb[0].mxu0 %v2141
        %v2247 = vpop.f32.mrb[0].mxu0
        %v2248 = vadd.f32 %v2175, %v2247
        %v2249 = vpop.f32.mrb[0].mxu0
        %2250 = vmatprep.mubr.f32.mxu0 0.0
        %2251 = vmatmul.mubr.f32.gmra.mrb[0].mxu0 %v2142
        %v2252 = vpop.f32.mrb[0].mxu0
        %v2253 = vadd.f32 %v2175, %v2252
        %v2254 = vpop.f32.mrb[0].mxu0
        %2255 = vmatprep.mubr.f32.mxu0 0.0
        %2256 = vmatmul.mubr.f32.gmra.mrb[0].mxu0 %v2143
        %v2257 = vpop.f32.mrb[0].mxu0
        %v2258 = vadd.f32 %v2175, %v2257
        %v2259 = vpop.f32.mrb[0].mxu0
        %2260 = vmatprep.mubr.f32.mxu0 0.0
        %2261 = vmatmul.mubr.f32.gmra.mrb[0].mxu0 %v2144
        %v2262 = vpop.f32.mrb[0].mxu0
        %v2263 = vadd.f32 %v2175, %v2262
        %v2264 = vpop.f32.mrb[0].mxu0
        %2265 = vmatprep.mubr.f32.mxu0 0.0
        %2266 = vmatmul.mubr.f32.gmra.mrb[0].mxu0 %v2145
        %v2267 = vpop.f32.mrb[0].mxu0
        %v2268 = vadd.f32 %v2175, %v2267
        %v2269 = vpop.f32.mrb[0].mxu0
        %2270 = vmatprep.mubr.f32.mxu0 0.0
        %2271 = vmatmul.mubr.f32.gmra.mrb[0].mxu0 %v2146
        %v2272 = vpop.f32.mrb[0].mxu0
        %v2273 = vadd.f32 %v2175, %v2272
        %v2274 = vpop.f32.mrb[0].mxu0
        %2275 = vmatprep.mubr.f32.mxu0 0.0
        %2276 = vmatmul.mubr.f32.gmra.mrb[0].mxu0 %v2147
        %v2277 = vpop.f32.mrb[0].mxu0
        %v2278 = vadd.f32 %v2175, %v2277
        %v2279 = vpop.f32.mrb[0].mxu0
        %2280 = vmatprep.mubr.f32.mxu0 0.0
        %2281 = vmatmul.mubr.f32.gmra.mrb[0].mxu0 %v2148
        %v2282 = vpop.f32.mrb[0].mxu0
        %v2283 = vadd.f32 %v2175, %v2282
        %v2284 = vpop.f32.mrb[0].mxu0
        %2285 = vmatprep.mubr.f32.mxu0 0.0
        %2286 = vmatmul.mubr.f32.gmra.mrb[0].mxu0 %v2149
        %v2287 = vpop.f32.mrb[0].mxu0
        %v2288 = vadd.f32 %v2175, %v2287
        %v2289 = vpop.f32.mrb[0].mxu0
        %2290 = vmatprep.mubr.f32.mxu0 0.0
        %2291 = vmatmul.mubr.f32.gmra.mrb[0].mxu0 %v2150
        %v2292 = vpop.f32.mrb[0].mxu0
        %v2293 = vadd.f32 %v2175, %v2292
        %v2294 = vpop.f32.mrb[0].mxu0
        %2295 = vmatprep.mubr.f32.mxu0 0.0
        %2296 = vmatmul.mubr.f32.gmra.mrb[0].mxu0 %v2151
        %v2297 = vpop.f32.mrb[0].mxu0
        %v2298 = vadd.f32 %v2175, %v2297
        %v2299 = vpop.f32.mrb[0].mxu0
        %2300 = vmatprep.mubr.f32.mxu0 0.0
        %2301 = vmatmul.mubr.f32.gmra.mrb[0].mxu0 %v2152
        %v2302 = vpop.f32.mrb[0].mxu0
        %v2303 = vadd.f32 %v2175, %v2302
        %v2304 = vpop.f32.mrb[0].mxu0
        %2305 = vmatprep.mubr.f32.mxu0 0.0
        %2306 = vmatmul.mubr.f32.gmra.mrb[0].mxu0 %v2153
        %v2307 = vpop.f32.mrb[0].mxu0
        %v2308 = vadd.f32 %v2175, %v2307
        %v2309 = vpop.f32.mrb[0].mxu0
        %2310 = vmatprep.mubr.f32.mxu0 0.0
        %2311 = vmatmul.mubr.f32.gmra.mrb[0].mxu0 %v2154
        %v2312 = vpop.f32.mrb[0].mxu0
        %v2313 = vadd.f32 %v2175, %v2312
        %v2314 = vpop.f32.mrb[0].mxu0
        %2315 = vmatprep.mubr.f32.mxu0 0.0
        %2316 = vmatmul.mubr.f32.gmra.mrb[0].mxu0 %v2155
        %v2317 = vpop.f32.mrb[0].mxu0
        %v2318 = vadd.f32 %v2175, %v2317
        %v2319 = vpop.f32.mrb[0].mxu0
        %2320 = vdwg.mxu0
        %v2321 = vmax.f32 %v2243, 0.0
        %v2322 = vmax.f32 %v2248, 0.0
        %v2323 = vmax.f32 %v2253, 0.0
        %v2324 = vmax.f32 %v2258, 0.0
        %v2325 = vmax.f32 %v2263, 0.0
        %v2326 = vmax.f32 %v2268, 0.0
        %v2327 = vmax.f32 %v2273, 0.0
        %v2328 = vmax.f32 %v2278, 0.0
        %v2329 = vmax.f32 %v2283, 0.0
        %v2330 = vmax.f32 %v2288, 0.0
        %v2331 = vmax.f32 %v2293, 0.0
        %v2332 = vmax.f32 %v2298, 0.0
        %v2333 = vmax.f32 %v2303, 0.0
        %v2334 = vmax.f32 %v2308, 0.0
        %v2335 = vmax.f32 %v2313, 0.0
        %v2336 = vmax.f32 %v2318, 0.0
        %v2337 = vsel %vm2139, %v2321, %v2243
        %v2338 = vsel %vm2139, %v2322, %v2248
        %v2339 = vsel %vm2139, %v2323, %v2253
        %v2340 = vsel %vm2139, %v2324, %v2258
        %v2341 = vsel %vm2139, %v2325, %v2263
        %v2342 = vsel %vm2139, %v2326, %v2268
        %v2343 = vsel %vm2139, %v2327, %v2273
        %v2344 = vsel %vm2139, %v2328, %v2278
        %v2345 = vsel %vm2139, %v2329, %v2283
        %v2346 = vsel %vm2139, %v2330, %v2288
        %v2347 = vsel %vm2139, %v2331, %v2293
        %v2348 = vsel %vm2139, %v2332, %v2298
        %v2349 = vsel %vm2139, %v2333, %v2303
        %v2350 = vsel %vm2139, %v2334, %v2308
        %v2351 = vsel %vm2139, %v2335, %v2313
        %v2352 = vsel %vm2139, %v2336, %v2318
        %v2353 = vlaneseq
        %v2354 = vshrl.u32 %v2353, 7
        %v2355 = vsub.s32 2, %v2354
        %v2356 = vrot.slane %v2063, %v2355
        %v2357 = vmul.f32 %v2337, %v2356
        %v2358 = vmul.f32 %v2338, %v2356
        %v2359 = vmul.f32 %v2339, %v2356
        %v2360 = vmul.f32 %v2340, %v2356
        %v2361 = vmul.f32 %v2341, %v2356
        %v2362 = vmul.f32 %v2342, %v2356
        %v2363 = vmul.f32 %v2343, %v2356
        %v2364 = vmul.f32 %v2344, %v2356
        %v2365 = vmul.f32 %v2345, %v2356
        %v2366 = vmul.f32 %v2346, %v2356
        %v2367 = vmul.f32 %v2347, %v2356
        %v2368 = vmul.f32 %v2348, %v2356
        %v2369 = vmul.f32 %v2349, %v2356
        %v2370 = vmul.f32 %v2350, %v2356
        %v2371 = vmul.f32 %v2351, %v2356
        %v2372 = vmul.f32 %v2352, %v2356
        %2373 = vadd.xlane.f32.xlu0 %v2357
        %v2374 = vpop.xlane.xlu0 %2373
        %2375 = vadd.xlane.f32.xlu0 %v2358
        %v2376 = vpop.xlane.xlu0 %2375
        %2377 = vadd.xlane.f32.xlu0 %v2359
        %v2378 = vpop.xlane.xlu0 %2377
        %2379 = vadd.xlane.f32.xlu0 %v2360
        %v2380 = vpop.xlane.xlu0 %2379
        %2381 = vadd.xlane.f32.xlu0 %v2361
        %v2382 = vpop.xlane.xlu0 %2381
        %2383 = vadd.xlane.f32.xlu0 %v2362
        %v2384 = vpop.xlane.xlu0 %2383
        %2385 = vadd.xlane.f32.xlu0 %v2363
        %v2386 = vpop.xlane.xlu0 %2385
        %2387 = vadd.xlane.f32.xlu0 %v2364
        %v2388 = vpop.xlane.xlu0 %2387
        %2389 = vadd.xlane.f32.xlu0 %v2365
        %v2390 = vpop.xlane.xlu0 %2389
        %2391 = vadd.xlane.f32.xlu0 %v2366
        %v2392 = vpop.xlane.xlu0 %2391
        %2393 = vadd.xlane.f32.xlu0 %v2367
        %v2394 = vpop.xlane.xlu0 %2393
        %2395 = vadd.xlane.f32.xlu0 %v2368
        %v2396 = vpop.xlane.xlu0 %2395
        %2397 = vadd.xlane.f32.xlu0 %v2369
        %v2398 = vpop.xlane.xlu0 %2397
        %2399 = vadd.xlane.f32.xlu0 %v2370
        %v2400 = vpop.xlane.xlu0 %2399
        %2401 = vadd.xlane.f32.xlu0 %v2371
        %v2402 = vpop.xlane.xlu0 %2401
        %2403 = vadd.xlane.f32.xlu0 %v2372
        %v2404 = vpop.xlane.xlu0 %2403
        %vm2405 = vcmask 7168
        %2406 = vst.msk [vmem:[%s214] sm:$0xff] %vm2405, %v2374
        %2407 = vst.msk [vmem:[%s214 + $0x8] sm:$0xff] %vm2405, %v2376
        %2408 = vst.msk [vmem:[%s214 + $0x10] sm:$0xff] %vm2405, %v2378
        %2409 = vst.msk [vmem:[%s214 + $0x18] sm:$0xff] %vm2405, %v2380
        %2410 = vst.msk [vmem:[%s214 + $0x20] sm:$0xff] %vm2405, %v2382
        %2411 = vst.msk [vmem:[%s214 + $0x28] sm:$0xff] %vm2405, %v2384
        %2412 = vst.msk [vmem:[%s214 + $0x30] sm:$0xff] %vm2405, %v2386
        %2413 = vst.msk [vmem:[%s214 + $0x38] sm:$0xff] %vm2405, %v2388
        %2414 = vst.msk [vmem:[%s214 + $0x40] sm:$0xff] %vm2405, %v2390
        %2415 = vst.msk [vmem:[%s214 + $0x48] sm:$0xff] %vm2405, %v2392
        %2416 = vst.msk [vmem:[%s214 + $0x50] sm:$0xff] %vm2405, %v2394
        %2417 = vst.msk [vmem:[%s214 + $0x58] sm:$0xff] %vm2405, %v2396
        %2418 = vst.msk [vmem:[%s214 + $0x60] sm:$0xff] %vm2405, %v2398
        %2419 = vst.msk [vmem:[%s214 + $0x68] sm:$0xff] %vm2405, %v2400
        %2420 = vst.msk [vmem:[%s214 + $0x70] sm:$0xff] %vm2405, %v2402
        %2421 = vst.msk [vmem:[%s214 + $0x78] sm:$0xff] %vm2405, %v2404
        %s2422 = smul.u32 16, %s16
        %p2423 = scmp.lt.s32.totalorder %s2422, 31
        %s2424 = scalar_select %p2423, %s2422, 31
        %s2425 = smul.addr %s2424, 8
        %s2426 = scalar_lea.vmem %s4, %s2425
        // Predicated region
        $region41: #{tpu_custom_call.1} parent=35 // pred_check
          %p2427 = pneg %p123
        $region42: #{tpu_custom_call.1} parent=35 // pred_check_branch
          %2429 = sbr.rel (%p2427) target = $region44
        $region43: #{tpu_custom_call.1} parent=35 // pred_region
          %s2430 = smul.u32 16, %s16
        $region44: #{tpu_custom_call.1} parent=35 // pred_fallthru
          _
      $region36: #{tpu_custom_call.1} parent=5 // pred_fallthru
        _
      %p2431 = scmp.le.s32.totalorder 2, %s11
      // Predicated region
      $region45: #{tpu_custom_call.1} parent=5 // pred_check
        %p2432 = pneg %p2431
      $region46: #{tpu_custom_call.1} parent=5 // pred_check_branch
        %2434 = sbr.rel (%p2432) target = $region48
      $region47: #{tpu_custom_call.1} parent=5 // pred_region
        %s2435 = ssub.s32 %s11, 2
        // Predicated region
        $region49: #{tpu_custom_call.1} parent=47 // pred_check
          %p2436 = pneg %p129
        $region50: #{tpu_custom_call.1} parent=47 // pred_check_branch
          %2438 = sbr.rel (%p2436) target = $region52
        $region51: #{tpu_custom_call.1} parent=47 // pred_region
          %s2439 = smul.u32 16, %s17
          %p2440 = scmp.lt.s32.totalorder %s2439, 31
          %s2441 = scalar_select %p2440, %s2439, 31
          %s2442 = smul.addr %s2441, 8
          %s2443 = scalar_lea.vmem %s4, %s2442
        $region52: #{tpu_custom_call.1} parent=47 // pred_fallthru
          _
      $region48: #{tpu_custom_call.1} parent=5 // pred_fallthru
        _
    $region6: #{tpu_custom_call.1} parent=1 // loop_footer
      %s15 = sadd.s32 1, %s11
    $region7: #{tpu_custom_call.1} parent=1 // loop_footer_branch
      %10 = sbr.rel target = $region3
    $region8: #{tpu_custom_call.1} parent=1 // loop_exit
      _
    %2444 = vsyncpa [#allocation3], 1
    %s2445 = scalar_lea.sflag [#allocation3], 1
    %2446 = vsyncpa %s2445, 1

</llo_original>
